<compile_context>
chip_gen: v5e
topology: v5e:2x2
jax: 0.10.0
libtpu: 0.0.40
codegen_flags: <defaults>
</compile_context>

<pallas_src>
import functools

import jax
import jax.numpy as jnp
from jax import lax
from jax.experimental import pallas as pl
from jax.experimental.pallas import tpu as pltpu

BN_EPS = 1e-5
LANE = 128


def _round_up(x, m):
    return (x + m - 1) // m * m


def _pad_rows(m_true):
    """Padded M extent: multiple of 8, and of 128 once it exceeds 128."""
    m8 = _round_up(max(m_true, 1), 8)
    return m8 if m8 <= 128 else _round_up(m8, 128)


def _pick_tile(dim_pad, cap=512):
    """Largest 256/128-aligned tile <= cap dividing dim_pad (mult. of 128)."""
    if dim_pad <= cap:
        return dim_pad
    for t in (1024, 512, 256, 128):
        if t <= cap and dim_pad % t == 0:
            return t
    return 128


def _pick_tm(m_pad, n_other):
    """M tile dividing m_pad; prefer 512/256 but keep >=2 parallel blocks."""
    if m_pad <= 128:
        return m_pad
    for t in (512, 256):
        if m_pad % t == 0 and (m_pad // t) * max(n_other, 1) >= 2:
            return t
    return 128


def _pick_ew_tiles(m_pad, c_pad):
    """Large lane-dense tiles for the memory-bound elementwise passes."""
    tn = c_pad if c_pad <= 512 else _pick_tile(c_pad, cap=512)
    n_c = c_pad // tn
    for t in (512, 256, 128):
        if m_pad % t == 0 and (m_pad // t) * n_c >= 2:
            return t, tn
    return m_pad, tn


# ------------- pass 1: tiled matmul + centered BN partial stats -------------- #

def _matmul_stats_kernel(*refs, fold, m_true, tm):
    """grid = (M tiles, C tiles, K tiles); K (reduction) last.

    Inputs : p [tm,tk] bf16 patches, w [tk,tn] bf16 weights,
             (fold only) prev_scale/prev_shift [1,tk] f32 (previous conv's BN).
    Outputs: y [tm,tn] bf16 pre-BN conv result,
             stats [8,tn] f32 (row0 = masked sum, row1 = centered sum-of-squares).
    Scratch: acc [tm,tn] f32.
    """
    if fold:
        p_ref, w_ref, sc_ref, sh_ref, y_ref, stats_ref, acc_ref = refs
    else:
        p_ref, w_ref, y_ref, stats_ref, acc_ref = refs
        sc_ref = sh_ref = None

    i = pl.program_id(0)
    k = pl.program_id(2)

    @pl.when(k == 0)
    def _():
        acc_ref[...] = jnp.zeros_like(acc_ref)

    p = p_ref[...]
    if fold:
        # relu(bn_prev(.)) applied to the loaded tile (free VPU filler under MXU).
        pf = p.astype(jnp.float32) * sc_ref[...] + sh_ref[...]
        pf = jnp.maximum(pf, 0.0)
        # Padded M rows must stay exactly zero (keeps stats & output clean).
        rows = i * tm + lax.broadcasted_iota(jnp.int32, (tm, 1), 0)
        pf = jnp.where(rows < m_true, pf, 0.0)
        p = pf.astype(jnp.bfloat16)

    acc_ref[...] += jnp.dot(p, w_ref[...], preferred_element_type=jnp.float32)

    @pl.when(k == pl.num_programs(2) - 1)
    def _():
        y = acc_ref[...]
        y_ref[...] = y.astype(y_ref.dtype)        # bf16 store; stats stay f32
        rows = i * tm + lax.broadcasted_iota(jnp.int32, (tm, 1), 0)
        valid = (rows < m_true).astype(jnp.float32)
        n_valid = jnp.minimum(tm, m_true - i * tm).astype(jnp.float32)
        s = jnp.sum(y * valid, axis=0, keepdims=True)
        mu = s / n_valid
        d = (y - mu) * valid
        css = jnp.sum(d * d, axis=0, keepdims=True)
        rid = lax.broadcasted_iota(jnp.int32, stats_ref.shape, 0)
        stats_ref[...] = jnp.where(rid == 0, s, jnp.where(rid == 1, css, 0.0))


def _matmul_stats_call(patches_pad, w_pad, m_true, cout,
                       prev_scale=None, prev_shift=None):
    """Gridded matmul; returns bf16 y_pad plus per-channel batch mean/var."""
    m_pad, k_pad = patches_pad.shape
    k_pad_w, c_pad = w_pad.shape
    assert k_pad_w == k_pad
    tn = _pick_tile(c_pad)
    n_c = c_pad // tn
    tm = _pick_tm(m_pad, n_c)
    n_m = m_pad // tm
    tk = _pick_tile(k_pad)
    n_k = k_pad // tk

    fold = prev_scale is not None
    kernel = functools.partial(_matmul_stats_kernel,
                               fold=fold, m_true=m_true, tm=tm)

    in_specs = [pl.BlockSpec((tm, tk), lambda i, c, k: (i, k)),
                pl.BlockSpec((tk, tn), lambda i, c, k: (k, c))]
    args = [patches_pad, w_pad]
    if fold:
        in_specs += [pl.BlockSpec((1, tk), lambda i, c, k: (0, k)),
                     pl.BlockSpec((1, tk), lambda i, c, k: (0, k))]
        args += [prev_scale, prev_shift]

    flops = 2 * m_pad * k_pad * c_pad
    bytes_accessed = (m_pad * k_pad * 2 + k_pad * c_pad * 2
                      + m_pad * c_pad * 2 + n_m * 8 * c_pad * 4)

    y_pad, stats = pl.pallas_call(
        kernel,
        out_shape=(jax.ShapeDtypeStruct((m_pad, c_pad), jnp.bfloat16),
                   jax.ShapeDtypeStruct((n_m * 8, c_pad), jnp.float32)),
        grid_spec=pltpu.PrefetchScalarGridSpec(
            num_scalar_prefetch=0,
            grid=(n_m, n_c, n_k),
            in_specs=in_specs,
            out_specs=[pl.BlockSpec((tm, tn), lambda i, c, k: (i, c)),
                       pl.BlockSpec((8, tn), lambda i, c, k: (i, c))],
            scratch_shapes=[pltpu.VMEM((tm, tn), jnp.float32)]),
        compiler_params=pltpu.CompilerParams(
            dimension_semantics=("parallel", "parallel", "arbitrary"),
            vmem_limit_bytes=48 * 1024 * 1024),
        cost_estimate=pl.CostEstimate(flops=flops, transcendentals=0,
                                      bytes_accessed=bytes_accessed),
    )(*args)

    # Combine per-tile centered stats (parallel-variance formula, f32).
    stats = stats.reshape(n_m, 8, c_pad)
    s_i = stats[:, 0, :]
    css_i = stats[:, 1, :]
    counts = jnp.asarray([min(tm, m_true - i * tm) for i in range(n_m)],
                         jnp.float32).reshape(n_m, 1)
    mu_i = s_i / counts
    mean = jnp.sum(s_i, axis=0) / m_true
    var = (jnp.sum(css_i, axis=0)
           + jnp.sum(counts * jnp.square(mu_i - mean[None, :]), axis=0)) / m_true
    var = jnp.maximum(var, 0.0)

    meta = dict(m_true=m_true, m_pad=m_pad, c_pad=c_pad, cout=cout)
    return y_pad, mean, var, meta


def _conv_pass1_nhwc(x_nhwc, w, stride, padding):
    """Conv2d pass-1: im2col (XLA, bf16) + Pallas matmul with BN stats."""
    n, h, wd, cin = x_nhwc.shape
    cout, cin_w, kh, kw = w.shape
    assert cin == cin_w

    xb = x_nhwc.astype(jnp.bfloat16)
    xp = jnp.pad(xb, ((0, 0), (padding, padding), (padding, padding), (0, 0)))
    ho = (h + 2 * padding - kh) // stride + 1
    wo = (wd + 2 * padding - kw) // stride + 1

    if kh == 1 and kw == 1 and padding == 0:
        patches = xp[:, ::stride, ::stride, :].reshape(n * ho * wo, cin)
    else:
        cols = [xp[:, i:i + (ho - 1) * stride + 1:stride,
                      j:j + (wo - 1) * stride + 1:stride, :]
                for i in range(kh) for j in range(kw)]
        patches = jnp.concatenate(cols, axis=-1).reshape(n * ho * wo,
                                                         kh * kw * cin)

    m_true, k_true = patches.shape
    m_pad = _pad_rows(m_true)
    k_pad = _round_up(k_true, LANE)
    c_pad = _round_up(cout, LANE)

    patches = jnp.pad(patches, ((0, m_pad - m_true), (0, k_pad - k_true)))
    w_mat = jnp.transpose(w, (2, 3, 1, 0)).reshape(k_true, cout)
    w_mat = jnp.pad(w_mat, ((0, k_pad - k_true),
                            (0, c_pad - cout))).astype(jnp.bfloat16)

    y_pad, mean, var, meta = _matmul_stats_call(patches, w_mat, m_true, cout)
    meta.update(n=n, ho=ho, wo=wo)
    return y_pad, mean, var, meta


def _bn_scale_shift(mean, var, gamma, beta, cout, c_pad):
    inv = lax.rsqrt(var + BN_EPS)
    g = jnp.pad(gamma, (0, c_pad - cout))       # padded channels -> scale/shift 0
    b = jnp.pad(beta, (0, c_pad - cout))
    scale = (g * inv).astype(jnp.float32).reshape(1, c_pad)
    shift = (b - mean * g * inv).astype(jnp.float32).reshape(1, c_pad)
    return scale, shift


# ------------- pass 2: elementwise BN(+ReLU) and final fused kernels --------- #

def _bn_act_kernel(y_ref, scale_ref, shift_ref, o_ref, *, apply_relu):
    y = y_ref[...].astype(jnp.float32) * scale_ref[...] + shift_ref[...]
    if apply_relu:
        y = jnp.maximum(y, 0.0)
    o_ref[...] = y.astype(o_ref.dtype)


def _final_identity_kernel(y_ref, scale_ref, shift_ref, res_ref, o_ref):
    # out = relu( relu(bn3(y3)) + residual )
    f = jnp.maximum(y_ref[...].astype(jnp.float32) * scale_ref[...]
                    + shift_ref[...], 0.0)
    o_ref[...] = jnp.maximum(f + res_ref[...].astype(jnp.float32),
                             0.0).astype(o_ref.dtype)


def _final_project_kernel(y_ref, scale_ref, shift_ref,
                          yp_ref, scale_p_ref, shift_p_ref, o_ref):
    # out = relu( relu(bn3(y3)) + bn_proj(y_proj) )   (projection BN fused here)
    f = jnp.maximum(y_ref[...].astype(jnp.float32) * scale_ref[...]
                    + shift_ref[...], 0.0)
    idn = yp_ref[...].astype(jnp.float32) * scale_p_ref[...] + shift_p_ref[...]
    o_ref[...] = jnp.maximum(f + idn, 0.0).astype(o_ref.dtype)


def _elementwise_call(kernel, args, big_flags, m_pad, c_pad, out_dtype):
    """Run a 2-D-gridded elementwise kernel with large lane-dense tiles."""
    tm, tn = _pick_ew_tiles(m_pad, c_pad)
    big = pl.BlockSpec((tm, tn), lambda i, c: (i, c))
    vec = pl.BlockSpec((1, tn), lambda i, c: (0, c))
    in_specs = [big if f else vec for f in big_flags]
    return pl.pallas_call(
        kernel,
        out_shape=jax.ShapeDtypeStruct((m_pad, c_pad), out_dtype),
        grid_spec=pltpu.PrefetchScalarGridSpec(
            num_scalar_prefetch=0,
            grid=(m_pad // tm, c_pad // tn),
            in_specs=in_specs,
            out_specs=big),
        compiler_params=pltpu.CompilerParams(
            dimension_semantics=("parallel", "parallel")),
    )(*args)


# ----------------------------- bottleneck block ------------------------------ #

def bottleneck_block_apply(x_nchw, params):
    """Forward of bottleneck_block; input/output in PyTorch NCHW layout."""
    x = jnp.transpose(x_nchw, (0, 2, 3, 1)).astype(jnp.float32)   # NCHW -> NHWC
    downsample, first = params["downsample"], params["first"]
    stride = 2 if downsample else 1

    # conv_1 (1x1, s1): matmul + stats, then BN+ReLU pass producing a bf16
    # NHWC activation for the 3x3 im2col.
    w1, g1, b1 = params["conv_1"]
    y1, mean1, var1, meta1 = _conv_pass1_nhwc(x, w1, 1, 0)
    s1, sh1 = _bn_scale_shift(mean1, var1, g1, b1, meta1["cout"], meta1["c_pad"])
    act1_flat = _elementwise_call(
        functools.partial(_bn_act_kernel, apply_relu=True),
        (y1, s1, sh1), (True, False, False),
        meta1["m_pad"], meta1["c_pad"], jnp.bfloat16)
    act1 = act1_flat[:meta1["m_true"], :meta1["cout"]].reshape(
        meta1["n"], meta1["ho"], meta1["wo"], meta1["cout"])

    # conv_2 (3x3, stride): pass-1 only; its BN+ReLU is folded into conv_3.
    w2, g2, b2 = params["conv_2"]
    y2, mean2, var2, meta2 = _conv_pass1_nhwc(act1, w2, stride, 1)
    s2, sh2 = _bn_scale_shift(mean2, var2, g2, b2, meta2["cout"], meta2["c_pad"])

    # conv_3 (1x1, s1): consumes conv_2's raw bf16 flat output directly; the
    # relu(bn2(.)) prologue runs inside the matmul kernel (K = conv_2 channels).
    w3, g3, b3 = params["conv_3"]
    cout3 = w3.shape[0]
    k_true3, c_pad2 = meta2["cout"], meta2["c_pad"]
    c_pad3 = _round_up(cout3, LANE)
    w3_mat = jnp.transpose(w3, (2, 3, 1, 0)).reshape(k_true3, cout3)
    w3_mat = jnp.pad(w3_mat, ((0, c_pad2 - k_true3),
                              (0, c_pad3 - cout3))).astype(jnp.bfloat16)
    y3, mean3, var3, meta3 = _matmul_stats_call(y2, w3_mat, meta2["m_true"],
                                                cout3, prev_scale=s2,
                                                prev_shift=sh2)
    s3, sh3 = _bn_scale_shift(mean3, var3, g3, b3, meta3["cout"], meta3["c_pad"])
    meta3.update(n=meta2["n"], ho=meta2["ho"], wo=meta2["wo"])
    m_pad3, c_pad3 = y3.shape

    # Final fused pass: BN3 + ReLU + residual add + ReLU (projection BN fused).
    if downsample or first:
        wp, gp, bp = params["project"]
        yp, mean_p, var_p, meta_p = _conv_pass1_nhwc(x, wp, stride, 0)
        assert yp.shape == y3.shape, (yp.shape, y3.shape)
        sp, shp = _bn_scale_shift(mean_p, var_p, gp, bp,
                                  meta_p["cout"], meta_p["c_pad"])
        out_flat = _elementwise_call(
            _final_project_kernel,
            (y3, s3, sh3, yp, sp, shp),
            (True, False, False, True, False, False),
            m_pad3, c_pad3, jnp.float32)
    else:
        nm, hm, wm, cm = x.shape
        res = jnp.pad(x.reshape(nm * hm * wm, cm),
                      ((0, m_pad3 - nm * hm * wm), (0, c_pad3 - cm)))
        out_flat = _elementwise_call(
            _final_identity_kernel,
            (y3, s3, sh3, res),
            (True, False, False, True),
            m_pad3, c_pad3, jnp.float32)

    out = out_flat[:meta3["m_true"], :meta3["cout"]].reshape(
        meta3["n"], meta3["ho"], meta3["wo"], meta3["cout"])
    return jnp.transpose(out, (0, 3, 1, 2))                        # NHWC -> NCHW


# ------------------------ deterministic parameter init ----------------------- #

def init_conv_block_params(key, in_ch, out_ch, ksize):
    w = 0.1 * jax.random.normal(key, (out_ch, in_ch, ksize, ksize), jnp.float32)
    gamma = jnp.ones((out_ch,), jnp.float32)    # nn.BatchNorm2d defaults
    beta = jnp.zeros((out_ch,), jnp.float32)
    # Conv bias omitted: it is exactly cancelled by the BN mean subtraction.
    return (w, gamma, beta)


def init_bottleneck_params(key, in_ch, out_ch):
    downsample = out_ch // in_ch == 2
    first = out_ch // in_ch == 4
    res_ch = in_ch // 4
    if downsample:
        res_ch = in_ch // 2
    if first:
        res_ch = in_ch
    k1, k2, k3, kp = jax.random.split(key, 4)
    params = {
        "downsample": downsample,
        "first": first,
        "conv_1": init_conv_block_params(k1, in_ch, res_ch, 1),
        "conv_2": init_conv_block_params(k2, res_ch, res_ch, 3),
        "conv_3": init_conv_block_params(k3, res_ch, out_ch, 1),
    }
    if downsample or first:
        params["project"] = init_conv_block_params(kp, in_ch, out_ch, 1)
    return params


# ------------------------ pure-JAX reference (for checking) ------------------ #

def _conv_bn_ref(x, layer, stride, padding, apply_relu):
    w, gamma, beta = layer
    y = lax.conv_general_dilated(
        x.astype(jnp.bfloat16),
        jnp.transpose(w, (2, 3, 1, 0)).astype(jnp.bfloat16),
        window_strides=(stride, stride),
        padding=[(padding, padding), (padding, padding)],
        dimension_numbers=("NHWC", "HWIO", "NHWC"),
        preferred_element_type=jnp.float32)
    mean = jnp.mean(y, axis=(0, 1, 2), keepdims=True)
    var = jnp.mean(jnp.square(y - mean), axis=(0, 1, 2), keepdims=True)
    yq = y.astype(jnp.bfloat16).astype(jnp.float32)   # mirror bf16 y storage
    out = (yq - mean) * lax.rsqrt(var + BN_EPS) * gamma + beta
    if apply_relu:
        out = jnp.maximum(out, 0.0)
    return out


def bottleneck_block_ref(x_nchw, params):
    x = jnp.transpose(x_nchw, (0, 2, 3, 1)).astype(jnp.float32)
    stride = 2 if params["downsample"] else 1
    f = _conv_bn_ref(x, params["conv_1"], 1, 0, True)
    f = _conv_bn_ref(f, params["conv_2"], stride, 1, True)
    f = _conv_bn_ref(f, params["conv_3"], 1, 0, True)
    if params["downsample"] or params["first"]:
        idn = _conv_bn_ref(x, params["project"], stride, 0, False)
    else:
        idn = x
    h = jnp.maximum(f + idn, 0.0)
    return jnp.transpose(h, (0, 3, 1, 2))


# ----------------------------------- main ------------------------------------ #

if __name__ == "__main__":
    key = jax.random.PRNGKey(0)
    k_x1, k_p1, k_x2, k_p2 = jax.random.split(key, 4)

    # Case 1: downsample block (out//in == 2 -> stride-2 3x3 + 1x1 projection).
    x1 = jax.random.normal(k_x1, (2, 8, 16, 16), jnp.float32)    # NCHW
    p1 = init_bottleneck_params(k_p1, 8, 16)
    out1 = jax.block_until_ready(bottleneck_block_apply(x1, p1))
    ref1 = jax.block_until_ready(bottleneck_block_ref(x1, p1))
    assert out1.shape == (2, 16, 8, 8), out1.shape
    err1 = float(jnp.max(jnp.abs(out1 - ref1)))
    assert jnp.allclose(out1, ref1, atol=1e-2, rtol=1e-2), err1

    # Case 2: identity block (out == in -> plain residual add path).
    x2 = jax.random.normal(k_x2, (2, 16, 16, 16), jnp.float32)   # NCHW
    p2 = init_bottleneck_params(k_p2, 16, 16)
    out2 = jax.block_until_ready(bottleneck_block_apply(x2, p2))
    ref2 = jax.block_until_ready(bottleneck_block_ref(x2, p2))
    assert out2.shape == (2, 16, 16, 16), out2.shape
    err2 = float(jnp.max(jnp.abs(out2 - ref2)))
    assert jnp.allclose(out2, ref2, atol=1e-2, rtol=1e-2), err2

    print("KERNEL_OK")
</pallas_src>

<mosaic_0001>
module attributes {stable_mosaic.version = 11 : i64} {
  func.func @_matmul_stats_kernel(%arg0: i32, %arg1: i32, %arg2: i32, %arg3: memref<256x128xbf16, #tpu.memory_space<vmem>>, %arg4: memref<128x128xbf16, #tpu.memory_space<vmem>>, %arg5: memref<256x128xbf16, #tpu.memory_space<vmem>>, %arg6: memref<8x128xf32, #tpu.memory_space<vmem>>, %arg7: memref<256x128xf32, #tpu.memory_space<vmem>>) attributes {dimension_semantics = [#tpu.dimension_semantics<parallel>, #tpu.dimension_semantics<parallel>, #tpu.dimension_semantics<arbitrary>], iteration_bounds = array<i64: 2, 1, 1>, scalar_prefetch = 0 : i64, scratch_operands = 1 : i64, tpu.core_type = #tpu.core_type<tc>, window_params = [{transform_indices = @transform_0, window_bounds = array<i64: 256, 128>}, {transform_indices = @transform_1, window_bounds = array<i64: 128, 128>}, {transform_indices = @transform_2, window_bounds = array<i64: 256, 128>}, {transform_indices = @transform_3, window_bounds = array<i64: 8, 128>}]} {
    %c0_i32 = arith.constant 0 : i32
    %0 = arith.cmpi eq, %arg2, %c0_i32 : i32
    %1 = arith.extui %0 : i1 to i32
    %c0_i32_0 = arith.constant 0 : i32
    %2 = arith.cmpi ne, %1, %c0_i32_0 : i32
    scf.if %2 {
      %cst_10 = arith.constant 0.000000e+00 : f32
      %12 = vector.broadcast %cst_10 : f32 to vector<256x128xf32>
      %c0_11 = arith.constant 0 : index
      %c0_12 = arith.constant 0 : index
      %13 = vector.load %arg7[%c0_11, %c0_12] : memref<256x128xf32, #tpu.memory_space<vmem>>, vector<256x128xf32>
      tpu.vector_store %arg7[%c0_11, %c0_12], %12 {strides = array<i32>} : memref<256x128xf32, #tpu.memory_space<vmem>>, vector<256x128xf32>,
    } else {
    }
    %c0 = arith.constant 0 : index
    %c0_1 = arith.constant 0 : index
    %3 = vector.load %arg3[%c0, %c0_1] : memref<256x128xbf16, #tpu.memory_space<vmem>>, vector<256x128xbf16>
    %c0_2 = arith.constant 0 : index
    %c0_3 = arith.constant 0 : index
    %4 = vector.load %arg7[%c0_2, %c0_3] : memref<256x128xf32, #tpu.memory_space<vmem>>, vector<256x128xf32>
    %c0_4 = arith.constant 0 : index
    %c0_5 = arith.constant 0 : index
    %5 = vector.load %arg4[%c0_4, %c0_5] : memref<128x128xbf16, #tpu.memory_space<vmem>>, vector<128x128xbf16>
    %cst = arith.constant dense<0.000000e+00> : vector<256x128xf32>
    %6 = tpu.matmul %3, %5, %cst {dimension_numbers = #tpu.dot_dimension_numbers<[1], [0], [0], [1], [0, 0, 1, 1], [], []>} : vector<256x128xbf16>, vector<128x128xbf16>, vector<256x128xf32> -> vector<256x128xf32>
    %7 = arith.addf %4, %6 : vector<256x128xf32>
    %c0_6 = arith.constant 0 : index
    %c0_7 = arith.constant 0 : index
    %8 = vector.load %arg7[%c0_6, %c0_7] : memref<256x128xf32, #tpu.memory_space<vmem>>, vector<256x128xf32>
    tpu.vector_store %arg7[%c0_6, %c0_7], %7 {strides = array<i32>} : memref<256x128xf32, #tpu.memory_space<vmem>>, vector<256x128xf32>,
    %c0_i32_8 = arith.constant 0 : i32
    %9 = arith.cmpi eq, %arg2, %c0_i32_8 : i32
    %10 = arith.extui %9 : i1 to i32
    %c0_i32_9 = arith.constant 0 : i32
    %11 = arith.cmpi ne, %10, %c0_i32_9 : i32
    scf.if %11 {
      %c0_10 = arith.constant 0 : index
      %c0_11 = arith.constant 0 : index
      %12 = vector.load %arg7[%c0_10, %c0_11] : memref<256x128xf32, #tpu.memory_space<vmem>>, vector<256x128xf32>
      %13 = arith.truncf %12 : vector<256x128xf32> to vector<256x128xbf16>
      %c0_12 = arith.constant 0 : index
      %c0_13 = arith.constant 0 : index
      %14 = vector.load %arg5[%c0_12, %c0_13] : memref<256x128xbf16, #tpu.memory_space<vmem>>, vector<256x128xbf16>
      tpu.vector_store %arg5[%c0_12, %c0_13], %13 {strides = array<i32>} : memref<256x128xbf16, #tpu.memory_space<vmem>>, vector<256x128xbf16>,
      %c256_i32 = arith.constant 256 : i32
      %15 = arith.muli %arg0, %c256_i32 : i32
      %16 = tpu.iota {dimensions = array<i32: 0>} : vector<256x1xi32>
      %17 = vector.broadcast %15 : i32 to vector<256x1xi32>
      %18 = arith.addi %17, %16 : vector<256x1xi32>
      %c512_i32 = arith.constant 512 : i32
      %19 = vector.broadcast %c512_i32 : i32 to vector<256x1xi32>
      %20 = arith.cmpi slt, %18, %19 : vector<256x1xi32>
      %21 = arith.extui %20 : vector<256x1xi1> to vector<256x1xi32>
      %22 = arith.sitofp %21 : vector<256x1xi32> to vector<256x1xf32>
      %c256_i32_14 = arith.constant 256 : i32
      %23 = arith.muli %arg0, %c256_i32_14 : i32
      %c512_i32_15 = arith.constant 512 : i32
      %24 = arith.subi %c512_i32_15, %23 : i32
      %c256_i32_16 = arith.constant 256 : i32
      %25 = arith.minsi %c256_i32_16, %24 : i32
      %26 = arith.sitofp %25 : i32 to f32
      %27 = vector.broadcast %22 : vector<256x1xf32> to vector<256x128xf32>
      %28 = arith.mulf %12, %27 : vector<256x128xf32>
      %cst_17 = arith.constant dense<0.000000e+00> : vector<128xf32>
      %29 = vector.multi_reduction <add>, %28, %cst_17 [0] : vector<256x128xf32> to vector<128xf32>
      %30 = vector.shape_cast %29 : vector<128xf32> to vector<1x128xf32>
      %31 = vector.broadcast %26 : f32 to vector<1x128xf32>
      %32 = arith.divf %30, %31 : vector<1x128xf32>
      %33 = vector.broadcast %32 : vector<1x128xf32> to vector<256x128xf32>
      %34 = arith.subf %12, %33 : vector<256x128xf32>
      %35 = vector.broadcast %22 : vector<256x1xf32> to vector<256x128xf32>
      %36 = arith.mulf %34, %35 : vector<256x128xf32>
      %37 = arith.mulf %36, %36 : vector<256x128xf32>
      %cst_18 = arith.constant dense<0.000000e+00> : vector<128xf32>
      %38 = vector.multi_reduction <add>, %37, %cst_18 [0] : vector<256x128xf32> to vector<128xf32>
      %39 = vector.shape_cast %38 : vector<128xf32> to vector<1x128xf32>
      %40 = tpu.iota {dimensions = array<i32: 0>} : vector<8x128xi32>
      %c0_i32_19 = arith.constant 0 : i32
      %41 = vector.broadcast %c0_i32_19 : i32 to vector<8x128xi32>
      %42 = arith.cmpi eq, %40, %41 : vector<8x128xi32>
      %c1_i32 = arith.constant 1 : i32
      %43 = vector.broadcast %c1_i32 : i32 to vector<8x128xi32>
      %44 = arith.cmpi eq, %40, %43 : vector<8x128xi32>
      %cst_20 = arith.constant 0.000000e+00 : f32
      %45 = vector.shape_cast %39 : vector<1x128xf32> to vector<1x128xf32>
      %46 = vector.broadcast %45 : vector<1x128xf32> to vector<8x128xf32>
      %47 = vector.broadcast %cst_20 : f32 to vector<8x128xf32>
      %48 = arith.select %44, %46, %47 : vector<8x128xi1>, vector<8x128xf32>
      %49 = vector.shape_cast %30 : vector<1x128xf32> to vector<1x128xf32>
      %50 = vector.broadcast %49 : vector<1x128xf32> to vector<8x128xf32>
      %51 = arith.select %42, %50, %48 : vector<8x128xi1>, vector<8x128xf32>
      %c0_21 = arith.constant 0 : index
      %c0_22 = arith.constant 0 : index
      %52 = vector.load %arg6[%c0_21, %c0_22] : memref<8x128xf32, #tpu.memory_space<vmem>>, vector<8x128xf32>
      tpu.vector_store %arg6[%c0_21, %c0_22], %51 {strides = array<i32>} : memref<8x128xf32, #tpu.memory_space<vmem>>, vector<8x128xf32>,
    } else {
    }
    return
  }
  func.func @transform_0(%arg0: i32, %arg1: i32, %arg2: i32) -> (i32, i32) {
    %c0_i32 = arith.constant 0 : i32
    return %arg0, %arg2 : i32, i32
  }
  func.func @transform_1(%arg0: i32, %arg1: i32, %arg2: i32) -> (i32, i32) {
    %c0_i32 = arith.constant 0 : i32
    return %arg2, %arg1 : i32, i32
  }
  func.func @transform_2(%arg0: i32, %arg1: i32, %arg2: i32) -> (i32, i32) {
    %c0_i32 = arith.constant 0 : i32
    return %arg0, %arg1 : i32, i32
  }
  func.func @transform_3(%arg0: i32, %arg1: i32, %arg2: i32) -> (i32, i32) {
    %c0_i32 = arith.constant 0 : i32
    return %arg0, %arg1 : i32, i32
  }
}

</mosaic_0001>

<llo_original>
// kernel: tpu_custom_call.1
$region0: #{tpu_custom_call.1}
  #allocation0 [shape = 'u32[]', space=smem, size = 0x4, offset = 0x4, fixed_abs, tag = 'smem constant byte address 0x4 - core index']
  #allocation1 [shape = 'u32[72,128]{1,0:T(1,128)}', space=vmem, size = 0x9000, scoped, tag = 'internal scratch']
  #allocation2 [shape = 'f32[256,128]{1,0:T(8,128)}', space=vmem, size = 0x20000, scoped, tag = 'scratch operand']
  %s0 = inlined_call_operand.hbm [shape: bf16[512,128], index: 0, kind: input, shape index: {}]
  %s1 = inlined_call_operand.hbm [shape: bf16[128,128], index: 1, kind: input, shape index: {}]
  %s2 = inlined_call_operand.hbm [shape: bf16[512,128], index: 2, kind: output, shape index: {0}]
  %s3 = inlined_call_operand.hbm [shape: f32[16,128], index: 3, kind: output, shape index: {1}]
  %4 = xla_tuple %s2, %s3
  %s5 = sld [smem:[#allocation0]]
  $region65: #{tpu_custom_call.1} parent=0
    _
  %s7 = ssub.s32 1, %s5
  %s8 = scalar_select 0, %s7, %s5
  $region1: #{tpu_custom_call.1} parent=0
    #allocation3 [shape = 'u8[131072]{0}', space=vmem, size = 0x20000, scoped, tag = 'input window, operand 0']
    #allocation4 [shape = 's32[2]{0}', space=sflag, size = 0x8, scoped, tag = 'scoped memory for tpu_custom_call.1']
    #allocation5 [shape = 's32[2]{0}', space=sflag, size = 0x8, scoped, tag = 'scoped memory for tpu_custom_call.1']
    #allocation6 [shape = 'u8[32768]{0}', space=vmem, size = 0x8000, scoped, tag = 'input window, operand 1, single buffered']
    #allocation7 [shape = 's32[1]{0}', space=sflag, size = 0x4, scoped, tag = 'scoped memory for tpu_custom_call.1']
    #allocation8 [shape = 'u8[131072]{0}', space=vmem, size = 0x20000, scoped, tag = 'output window, operand 0']
    #allocation9 [shape = 'u8[8192]{0}', space=vmem, size = 0x2000, scoped, tag = 'output window, operand 1']
    #allocation10 [shape = 's32[2]{0}', space=sflag, size = 0x8, scoped, tag = 'scoped memory for tpu_custom_call.1']
    %9 = vsyncpa [#allocation4], 0
    %s10 = scalar_lea.sflag [#allocation4], 1
    %11 = vsyncpa %s10, 0
    %12 = vsyncpa [#allocation7], 0
    %13 = vsyncpa [#allocation5], 0
    %s14 = scalar_lea.sflag [#allocation5], 1
    %15 = vsyncpa %s14, 0
    %16 = vsyncpa [#allocation10], 0
    %s17 = scalar_lea.sflag [#allocation10], 1
    %18 = vsyncpa %s17, 0
    loop: start=0, step=1, limit=4
    $region2: #{tpu_custom_call.1} parent=1 // loop_pre_header
      _
    $region3: #{tpu_custom_call.1} parent=1 // loop_header
      %s20 = sphi 0, %s24
      %p21 = scmp.ge.s32.totalorder %s20, 4
      %s27 = sphi 0, %s46
      %s28 = sphi 0, %s42
      %s29 = sphi 0, %s38
      %s30 = sphi 0, %s27
      %s31 = sphi 0, %s28
      %s32 = sphi 0, %s29
      %s33 = sphi 0, %s30
      %s34 = sphi 0, %s31
      %s35 = sphi 0, %s32
      %s51 = sphi 0, %s53
      %s54 = sphi 0, %s51
      %s55 = sphi 0, %s54
      %s71 = sphi 0, %s55
      %s79 = sphi 0, %s81
      %s82 = sphi 0, %s79
      %s83 = sphi 0, %s82
      %s99 = sphi 0, %s83
      %s107 = sphi 0, %s109
      %s110 = sphi 0, %s107
      %s111 = sphi 0, %s110
      %s127 = sphi 0, %s111
      %s135 = sphi 0, %s137
      %s138 = sphi 0, %s135
      %s139 = sphi 0, %s138
      %s155 = sphi 0, %s139
    $region4: #{tpu_custom_call.1} parent=1 // loop_header_branch
      %23 = sbr.rel (%p21) target = $region8
    $region5: #{tpu_custom_call.1} parent=1 // loop_body
      %s25 = ssub.s32 %s20, 1
      %s26 = ssub.s32 %s20, 2
      %s36 = sadd.s32 1, %s29
      %p37 = scmp.ge.s32.totalorder %s36, 1
      %s38 = scalar_select %p37, 0, %s36
      %s39 = sadd.s32 1, %s28
      %s40 = scalar_select %p37, %s39, %s28
      %p41 = scmp.ge.s32.totalorder %s40, 1
      %s42 = scalar_select %p41, 0, %s40
      %s43 = sadd.s32 1, %s27
      %s44 = scalar_select %p41, %s43, %s27
      %p45 = scmp.ge.s32.totalorder %s44, 2
      %s46 = scalar_select %p45, 0, %s44
      %s47 = ssub.s32 %s27, %s46
      %s48 = ssub.s32 %s29, %s38
      %s49 = sor.u32 %s47, %s48
      %p50 = scmp.eq.s32.totalorder %s49, 0
      %s52 = sadd.s32 %s51, 1
      %s53 = scalar_select %p50, %s51, %s52
      %p56 = pneg %p50
      %p57 = scmp.eq.s32.totalorder %s20, 1
      %p58 = por %p56, %p57
      %p59 = scmp.ne.s32.totalorder %s51, %s54
      %p60 = scmp.eq.s32.totalorder %s20, 0
      %p61 = por %p59, %p60
      %p62 = scmp.ne.s32.totalorder %s51, %s54
      %p63 = scmp.eq.s32.totalorder %s25, 1
      %p64 = por %p62, %p63
      %p65 = scmp.ne.s32.totalorder %s54, %s55
      %p66 = scmp.eq.s32.totalorder %s25, 0
      %p67 = por %p65, %p66
      %p68 = scmp.ne.s32.totalorder %s54, %s55
      %p69 = scmp.eq.s32.totalorder %s26, 1
      %p70 = por %p68, %p69
      %p72 = scmp.ne.s32.totalorder %s55, %s71
      %p73 = scmp.eq.s32.totalorder %s26, 0
      %p74 = por %p72, %p73
      %s75 = ssub.s32 %s29, %s38
      %s76 = ssub.s32 %s28, %s42
      %s77 = sor.u32 %s75, %s76
      %p78 = scmp.eq.s32.totalorder %s77, 0
      %s80 = sadd.s32 %s79, 1
      %s81 = scalar_select %p78, %s79, %s80
      %p84 = pneg %p78
      %p85 = scmp.eq.s32.totalorder %s20, 1
      %p86 = por %p84, %p85
      %p87 = scmp.ne.s32.totalorder %s79, %s82
      %p88 = scmp.eq.s32.totalorder %s20, 0
      %p89 = por %p87, %p88
      %p90 = scmp.ne.s32.totalorder %s79, %s82
      %p91 = scmp.eq.s32.totalorder %s25, 1
      %p92 = por %p90, %p91
      %p93 = scmp.ne.s32.totalorder %s82, %s83
      %p94 = scmp.eq.s32.totalorder %s25, 0
      %p95 = por %p93, %p94
      %p96 = scmp.ne.s32.totalorder %s82, %s83
      %p97 = scmp.eq.s32.totalorder %s26, 1
      %p98 = por %p96, %p97
      %p100 = scmp.ne.s32.totalorder %s83, %s99
      %p101 = scmp.eq.s32.totalorder %s26, 0
      %p102 = por %p100, %p101
      %s103 = ssub.s32 %s27, %s46
      %s104 = ssub.s32 %s28, %s42
      %s105 = sor.u32 %s103, %s104
      %p106 = scmp.eq.s32.totalorder %s105, 0
      %s108 = sadd.s32 %s107, 1
      %s109 = scalar_select %p106, %s107, %s108
      %p112 = pneg %p106
      %p113 = scmp.eq.s32.totalorder %s20, 1
      %p114 = por %p112, %p113
      %p115 = scmp.ne.s32.totalorder %s107, %s110
      %p116 = scmp.eq.s32.totalorder %s20, 0
      %p117 = por %p115, %p116
      %p118 = scmp.ne.s32.totalorder %s107, %s110
      %p119 = scmp.eq.s32.totalorder %s25, 1
      %p120 = por %p118, %p119
      %p121 = scmp.ne.s32.totalorder %s110, %s111
      %p122 = scmp.eq.s32.totalorder %s25, 0
      %p123 = por %p121, %p122
      %p124 = scmp.ne.s32.totalorder %s110, %s111
      %p125 = scmp.eq.s32.totalorder %s26, 1
      %p126 = por %p124, %p125
      %p128 = scmp.ne.s32.totalorder %s111, %s127
      %p129 = scmp.eq.s32.totalorder %s26, 0
      %p130 = por %p128, %p129
      %s131 = ssub.s32 %s27, %s46
      %s132 = ssub.s32 %s28, %s42
      %s133 = sor.u32 %s131, %s132
      %p134 = scmp.eq.s32.totalorder %s133, 0
      %s136 = sadd.s32 %s135, 1
      %s137 = scalar_select %p134, %s135, %s136
      %p140 = pneg %p134
      %p141 = scmp.eq.s32.totalorder %s20, 1
      %p142 = por %p140, %p141
      %p143 = scmp.ne.s32.totalorder %s135, %s138
      %p144 = scmp.eq.s32.totalorder %s20, 0
      %p145 = por %p143, %p144
      %p146 = scmp.ne.s32.totalorder %s135, %s138
      %p147 = scmp.eq.s32.totalorder %s25, 1
      %p148 = por %p146, %p147
      %p149 = scmp.ne.s32.totalorder %s138, %s139
      %p150 = scmp.eq.s32.totalorder %s25, 0
      %p151 = por %p149, %p150
      %p152 = scmp.ne.s32.totalorder %s138, %s139
      %p153 = scmp.eq.s32.totalorder %s26, 1
      %p154 = por %p152, %p153
      %p156 = scmp.ne.s32.totalorder %s139, %s155
      %p157 = scmp.eq.s32.totalorder %s26, 0
      %p158 = por %p156, %p157
      %p159 = scmp.le.s32.totalorder 1, %s20
      %p160 = scmp.lt.s32.totalorder %s20, 3
      %p161 = pnand %p159, %p160
      %p162 = pneg %p161
      // Predicated region
      $region9: #{tpu_custom_call.1} parent=5 // pred_check
        _
      $region10: #{tpu_custom_call.1} parent=5 // pred_check_branch
        %164 = sbr.rel (%p161) target = $region12
      $region11: #{tpu_custom_call.1} parent=5 // pred_region
        %s165 = ssub.s32 %s20, 1
        // Predicated region
        $region13: #{tpu_custom_call.1} parent=11 // pred_check
          %p166 = pneg %p95
        $region14: #{tpu_custom_call.1} parent=11 // pred_check_branch
          %168 = sbr.rel (%p166) target = $region16
        $region15: #{tpu_custom_call.1} parent=11 // pred_region
          %s169 = smul.u32 16, %s32
          %171 = vsyncadd [#allocation7], 0
          %s172 = sadd.s32 %s31, %s169
          %s173 = smul.addr %s172, 4
          %s174 = scalar_lea.hbm %s1, %s173
          %s175 = sshll.u32 %s174, 4
          %s176 = int_to_ptr.hbm [resolvable:$true] %s175
          %s177 = sshll.u32 [#allocation6], 4
          %s178 = int_to_ptr.vmem [resolvable:$true] %s177
          %183 = dma.hbm_to_vmem [thread:$0]  %s176, 1024, %s178, [#allocation7], 64, 64, 4
        $region16: #{tpu_custom_call.1} parent=11 // pred_fallthru
          _
      $region12: #{tpu_custom_call.1} parent=5 // pred_fallthru
        _
      %p184 = scmp.lt.s32.totalorder %s20, 2
      // Predicated region
      $region17: #{tpu_custom_call.1} parent=5 // pred_check
        %p185 = pneg %p184
      $region18: #{tpu_custom_call.1} parent=5 // pred_check_branch
        %187 = sbr.rel (%p185) target = $region20
      $region19: #{tpu_custom_call.1} parent=5 // pred_region
        // Predicated region
        $region21: #{tpu_custom_call.1} parent=19 // pred_check
          %p188 = pneg %p61
        $region22: #{tpu_custom_call.1} parent=19 // pred_check_branch
          %190 = sbr.rel (%p188) target = $region24
        $region23: #{tpu_custom_call.1} parent=19 // pred_region
          %s191 = sand.u32 %s51, 1
          %s192 = scalar_lea.sflag [#allocation4], %s191
          %s193 = sand.u32 %s51, 1
          %s194 = smul.addr %s193, 128
          %s195 = scalar_lea.vmem [#allocation3], %s194
          %s196 = smul.u32 32, %s27
          %198 = vsyncadd %s192, 0
          %s199 = sadd.s32 %s29, %s196
          %s200 = smul.addr %s199, 4
          %s201 = scalar_lea.hbm %s0, %s200
          %s202 = sshll.u32 %s201, 4
          %s203 = int_to_ptr.hbm [resolvable:$true] %s202
          %s204 = sshll.u32 %s195, 4
          %s205 = int_to_ptr.vmem [resolvable:$true] %s204
          %210 = dma.hbm_to_vmem [thread:$0]  %s203, 2048, %s205, %s192, 64, 64, 4
        $region24: #{tpu_custom_call.1} parent=19 // pred_fallthru
          _
      $region20: #{tpu_custom_call.1} parent=5 // pred_fallthru
        _
      %p211 = scmp.le.s32.totalorder 1, %s20
      %p212 = scmp.lt.s32.totalorder %s20, 3
      %p213 = pnand %p211, %p212
      %p214 = pneg %p213
      // Predicated region
      $region25: #{tpu_custom_call.1} parent=5 // pred_check
        _
      $region26: #{tpu_custom_call.1} parent=5 // pred_check_branch
        %216 = sbr.rel (%p213) target = $region28
      $region27: #{tpu_custom_call.1} parent=5 // pred_region
        %s217 = ssub.s32 %s20, 1
        %s218 = sand.u32 %s54, 1
        %s219 = scalar_lea.sflag [#allocation4], %s218
        %s220 = sand.u32 %s54, 1
        %s221 = smul.addr %s220, 128
        %s222 = scalar_lea.vmem [#allocation3], %s221
        // Predicated region
        $region29: #{tpu_custom_call.1} parent=27 // pred_check
          %p223 = pneg %p67
        $region30: #{tpu_custom_call.1} parent=27 // pred_check_branch
          %225 = sbr.rel (%p223) target = $region32
        $region31: #{tpu_custom_call.1} parent=27 // pred_region
          %227 = dma.done %s219, 2048
        $region32: #{tpu_custom_call.1} parent=27 // pred_fallthru
          _
        // Predicated region
        $region33: #{tpu_custom_call.1} parent=27 // pred_check
          %p228 = pneg %p95
        $region34: #{tpu_custom_call.1} parent=27 // pred_check_branch
          %230 = sbr.rel (%p228) target = $region36
        $region35: #{tpu_custom_call.1} parent=27 // pred_region
          %232 = dma.done [#allocation7], 1024
        $region36: #{tpu_custom_call.1} parent=27 // pred_fallthru
          _
        %s233 = sand.u32 %s54, 1
        %s234 = scalar_lea.sflag [#allocation4], %s233
        %s235 = sand.u32 %s54, 1
        %s236 = smul.addr %s235, 128
        %s237 = scalar_lea.vmem [#allocation3], %s236
        %p238 = pneg %p67
        %p239 = pneg %p64
        %p240 = pneg %p95
        %p241 = pneg %p92
        %p242 = pneg %p123
        %p243 = pneg %p120
        %s244 = sand.u32 %s110, 1
        %s245 = scalar_lea.sflag [#allocation5], %s244
        %s246 = sand.u32 %s110, 1
        %s247 = smul.addr %s246, 128
        %s248 = scalar_lea.vmem [#allocation8], %s247
        %p249 = pneg %p151
        %p250 = pneg %p148
        %s251 = sand.u32 %s138, 1
        %s252 = scalar_lea.sflag [#allocation10], %s251
        %s253 = sand.u32 %s138, 1
        %s254 = smul.addr %s253, 8
        %s255 = scalar_lea.vmem [#allocation9], %s254
        %s256 = smul.u32 32, %s30
        %s257 = smul.u32 16, %s32
        %s258 = smul.u32 32, %s30
        %p259 = scmp.eq.s32.totalorder %s32, 0
        // Predicated region
        $region37: #{tpu_custom_call.1} parent=27 // pred_check
          %p260 = pneg %p259
        $region38: #{tpu_custom_call.1} parent=27 // pred_check_branch
          %262 = sbr.rel (%p260) target = $region40
        $region39: #{tpu_custom_call.1} parent=27 // pred_region
          %263 = vst [vmem:[#allocation2] sm:$0xff] 0.0
          %264 = vst [vmem:[#allocation2 + $0x8] sm:$0xff] 0.0
          %265 = vst [vmem:[#allocation2 + $0x10] sm:$0xff] 0.0
          %266 = vst [vmem:[#allocation2 + $0x18] sm:$0xff] 0.0
          %267 = vst [vmem:[#allocation2 + $0x20] sm:$0xff] 0.0
          %268 = vst [vmem:[#allocation2 + $0x28] sm:$0xff] 0.0
          %269 = vst [vmem:[#allocation2 + $0x30] sm:$0xff] 0.0
          %270 = vst [vmem:[#allocation2 + $0x38] sm:$0xff] 0.0
          %271 = vst [vmem:[#allocation2 + $0x40] sm:$0xff] 0.0
          %272 = vst [vmem:[#allocation2 + $0x48] sm:$0xff] 0.0
          %273 = vst [vmem:[#allocation2 + $0x50] sm:$0xff] 0.0
          %274 = vst [vmem:[#allocation2 + $0x58] sm:$0xff] 0.0
          %275 = vst [vmem:[#allocation2 + $0x60] sm:$0xff] 0.0
          %276 = vst [vmem:[#allocation2 + $0x68] sm:$0xff] 0.0
          %277 = vst [vmem:[#allocation2 + $0x70] sm:$0xff] 0.0
          %278 = vst [vmem:[#allocation2 + $0x78] sm:$0xff] 0.0
          %279 = vst [vmem:[#allocation2 + $0x80] sm:$0xff] 0.0
          %280 = vst [vmem:[#allocation2 + $0x88] sm:$0xff] 0.0
          %281 = vst [vmem:[#allocation2 + $0x90] sm:$0xff] 0.0
          %282 = vst [vmem:[#allocation2 + $0x98] sm:$0xff] 0.0
          %283 = vst [vmem:[#allocation2 + $0xa0] sm:$0xff] 0.0
          %284 = vst [vmem:[#allocation2 + $0xa8] sm:$0xff] 0.0
          %285 = vst [vmem:[#allocation2 + $0xb0] sm:$0xff] 0.0
          %286 = vst [vmem:[#allocation2 + $0xb8] sm:$0xff] 0.0
          %287 = vst [vmem:[#allocation2 + $0xc0] sm:$0xff] 0.0
          %288 = vst [vmem:[#allocation2 + $0xc8] sm:$0xff] 0.0
          %289 = vst [vmem:[#allocation2 + $0xd0] sm:$0xff] 0.0
          %290 = vst [vmem:[#allocation2 + $0xd8] sm:$0xff] 0.0
          %291 = vst [vmem:[#allocation2 + $0xe0] sm:$0xff] 0.0
          %292 = vst [vmem:[#allocation2 + $0xe8] sm:$0xff] 0.0
          %293 = vst [vmem:[#allocation2 + $0xf0] sm:$0xff] 0.0
          %294 = vst [vmem:[#allocation2 + $0xf8] sm:$0xff] 0.0
        $region40: #{tpu_custom_call.1} parent=27 // pred_fallthru
          _
        %v295 = vld [vmem:[%s222] sm:$0xf]
        %v296 = vld [vmem:[%s222 + $0x4] sm:$0xf]
        %v297 = vld [vmem:[%s222 + $0x8] sm:$0xf]
        %v298 = vld [vmem:[%s222 + $0xc] sm:$0xf]
        %v299 = vld [vmem:[%s222 + $0x10] sm:$0xf]
        %v300 = vld [vmem:[%s222 + $0x14] sm:$0xf]
        %v301 = vld [vmem:[%s222 + $0x18] sm:$0xf]
        %v302 = vld [vmem:[%s222 + $0x1c] sm:$0xf]
        %v303 = vld [vmem:[%s222 + $0x20] sm:$0xf]
        %v304 = vld [vmem:[%s222 + $0x24] sm:$0xf]
        %v305 = vld [vmem:[%s222 + $0x28] sm:$0xf]
        %v306 = vld [vmem:[%s222 + $0x2c] sm:$0xf]
        %v307 = vld [vmem:[%s222 + $0x30] sm:$0xf]
        %v308 = vld [vmem:[%s222 + $0x34] sm:$0xf]
        %v309 = vld [vmem:[%s222 + $0x38] sm:$0xf]
        %v310 = vld [vmem:[%s222 + $0x3c] sm:$0xf]
        %v311 = vld [vmem:[%s222 + $0x40] sm:$0xf]
        %v312 = vld [vmem:[%s222 + $0x44] sm:$0xf]
        %v313 = vld [vmem:[%s222 + $0x48] sm:$0xf]
        %v314 = vld [vmem:[%s222 + $0x4c] sm:$0xf]
        %v315 = vld [vmem:[%s222 + $0x50] sm:$0xf]
        %v316 = vld [vmem:[%s222 + $0x54] sm:$0xf]
        %v317 = vld [vmem:[%s222 + $0x58] sm:$0xf]
        %v318 = vld [vmem:[%s222 + $0x5c] sm:$0xf]
        %v319 = vld [vmem:[%s222 + $0x60] sm:$0xf]
        %v320 = vld [vmem:[%s222 + $0x64] sm:$0xf]
        %v321 = vld [vmem:[%s222 + $0x68] sm:$0xf]
        %v322 = vld [vmem:[%s222 + $0x6c] sm:$0xf]
        %v323 = vld [vmem:[%s222 + $0x70] sm:$0xf]
        %v324 = vld [vmem:[%s222 + $0x74] sm:$0xf]
        %v325 = vld [vmem:[%s222 + $0x78] sm:$0xf]
        %v326 = vld [vmem:[%s222 + $0x7c] sm:$0xf]
        %v327 = vld [vmem:[#allocation2] sm:$0xff]
        %v328 = vld [vmem:[#allocation2 + $0x8] sm:$0xff]
        %v329 = vld [vmem:[#allocation2 + $0x10] sm:$0xff]
        %v330 = vld [vmem:[#allocation2 + $0x18] sm:$0xff]
        %v331 = vld [vmem:[#allocation2 + $0x20] sm:$0xff]
        %v332 = vld [vmem:[#allocation2 + $0x28] sm:$0xff]
        %v333 = vld [vmem:[#allocation2 + $0x30] sm:$0xff]
        %v334 = vld [vmem:[#allocation2 + $0x38] sm:$0xff]
        %v335 = vld [vmem:[#allocation2 + $0x40] sm:$0xff]
        %v336 = vld [vmem:[#allocation2 + $0x48] sm:$0xff]
        %v337 = vld [vmem:[#allocation2 + $0x50] sm:$0xff]
        %v338 = vld [vmem:[#allocation2 + $0x58] sm:$0xff]
        %v339 = vld [vmem:[#allocation2 + $0x60] sm:$0xff]
        %v340 = vld [vmem:[#allocation2 + $0x68] sm:$0xff]
        %v341 = vld [vmem:[#allocation2 + $0x70] sm:$0xff]
        %v342 = vld [vmem:[#allocation2 + $0x78] sm:$0xff]
        %v343 = vld [vmem:[#allocation2 + $0x80] sm:$0xff]
        %v344 = vld [vmem:[#allocation2 + $0x88] sm:$0xff]
        %v345 = vld [vmem:[#allocation2 + $0x90] sm:$0xff]
        %v346 = vld [vmem:[#allocation2 + $0x98] sm:$0xff]
        %v347 = vld [vmem:[#allocation2 + $0xa0] sm:$0xff]
        %v348 = vld [vmem:[#allocation2 + $0xa8] sm:$0xff]
        %v349 = vld [vmem:[#allocation2 + $0xb0] sm:$0xff]
        %v350 = vld [vmem:[#allocation2 + $0xb8] sm:$0xff]
        %v351 = vld [vmem:[#allocation2 + $0xc0] sm:$0xff]
        %v352 = vld [vmem:[#allocation2 + $0xc8] sm:$0xff]
        %v353 = vld [vmem:[#allocation2 + $0xd0] sm:$0xff]
        %v354 = vld [vmem:[#allocation2 + $0xd8] sm:$0xff]
        %v355 = vld [vmem:[#allocation2 + $0xe0] sm:$0xff]
        %v356 = vld [vmem:[#allocation2 + $0xe8] sm:$0xff]
        %v357 = vld [vmem:[#allocation2 + $0xf0] sm:$0xff]
        %v358 = vld [vmem:[#allocation2 + $0xf8] sm:$0xff]
        %v359 = vld [vmem:[#allocation6] sm:$0xf]
        %v360 = vld [vmem:[#allocation6 + $0x4] sm:$0xf]
        %v361 = vld [vmem:[#allocation6 + $0x8] sm:$0xf]
        %v362 = vld [vmem:[#allocation6 + $0xc] sm:$0xf]
        %v363 = vld [vmem:[#allocation6 + $0x10] sm:$0xf]
        %v364 = vld [vmem:[#allocation6 + $0x14] sm:$0xf]
        %v365 = vld [vmem:[#allocation6 + $0x18] sm:$0xf]
        %v366 = vld [vmem:[#allocation6 + $0x1c] sm:$0xf]
        %v367 = vld [vmem:[#allocation6 + $0x20] sm:$0xf]
        %v368 = vld [vmem:[#allocation6 + $0x24] sm:$0xf]
        %v369 = vld [vmem:[#allocation6 + $0x28] sm:$0xf]
        %v370 = vld [vmem:[#allocation6 + $0x2c] sm:$0xf]
        %v371 = vld [vmem:[#allocation6 + $0x30] sm:$0xf]
        %v372 = vld [vmem:[#allocation6 + $0x34] sm:$0xf]
        %v373 = vld [vmem:[#allocation6 + $0x38] sm:$0xf]
        %v374 = vld [vmem:[#allocation6 + $0x3c] sm:$0xf]
        %v407 = vunpack.c.l.b16 %v295
        %v408 = vunpack.c.l.b16 %v296
        %v409 = vunpack.c.l.b16 %v297
        %v410 = vunpack.c.l.b16 %v298
        %v411 = vunpack.c.l.b16 %v299
        %v412 = vunpack.c.l.b16 %v300
        %v413 = vunpack.c.l.b16 %v301
        %v414 = vunpack.c.l.b16 %v302
        %v415 = vunpack.c.l.b16 %v303
        %v416 = vunpack.c.l.b16 %v304
        %v417 = vunpack.c.l.b16 %v305
        %v418 = vunpack.c.l.b16 %v306
        %v419 = vunpack.c.l.b16 %v307
        %v420 = vunpack.c.l.b16 %v308
        %v421 = vunpack.c.l.b16 %v309
        %v422 = vunpack.c.l.b16 %v310
        %v423 = vunpack.c.l.b16 %v311
        %v424 = vunpack.c.l.b16 %v312
        %v425 = vunpack.c.l.b16 %v313
        %v426 = vunpack.c.l.b16 %v314
        %v427 = vunpack.c.l.b16 %v315
        %v428 = vunpack.c.l.b16 %v316
        %v429 = vunpack.c.l.b16 %v317
        %v430 = vunpack.c.l.b16 %v318
        %v431 = vunpack.c.l.b16 %v319
        %v432 = vunpack.c.l.b16 %v320
        %v433 = vunpack.c.l.b16 %v321
        %v434 = vunpack.c.l.b16 %v322
        %v435 = vunpack.c.l.b16 %v323
        %v436 = vunpack.c.l.b16 %v324
        %v437 = vunpack.c.l.b16 %v325
        %v438 = vunpack.c.l.b16 %v326
        %v439 = vpack.c.b16 %v408, %v407
        %v440 = vpack.c.b16 %v410, %v409
        %v441 = vpack.c.b16 %v412, %v411
        %v442 = vpack.c.b16 %v414, %v413
        %v443 = vpack.c.b16 %v416, %v415
        %v444 = vpack.c.b16 %v418, %v417
        %v445 = vpack.c.b16 %v420, %v419
        %v446 = vpack.c.b16 %v422, %v421
        %v447 = vpack.c.b16 %v424, %v423
        %v448 = vpack.c.b16 %v426, %v425
        %v449 = vpack.c.b16 %v428, %v427
        %v450 = vpack.c.b16 %v430, %v429
        %v451 = vpack.c.b16 %v432, %v431
        %v452 = vpack.c.b16 %v434, %v433
        %v453 = vpack.c.b16 %v436, %v435
        %v454 = vpack.c.b16 %v438, %v437
        %v487 = vunpack.c.l.b16 %v359
        %v488 = vunpack.c.l.b16 %v360
        %v489 = vunpack.c.l.b16 %v361
        %v490 = vunpack.c.l.b16 %v362
        %v491 = vunpack.c.l.b16 %v363
        %v492 = vunpack.c.l.b16 %v364
        %v493 = vunpack.c.l.b16 %v365
        %v494 = vunpack.c.l.b16 %v366
        %v495 = vunpack.c.l.b16 %v367
        %v496 = vunpack.c.l.b16 %v368
        %v497 = vunpack.c.l.b16 %v369
        %v498 = vunpack.c.l.b16 %v370
        %v499 = vunpack.c.l.b16 %v371
        %v500 = vunpack.c.l.b16 %v372
        %v501 = vunpack.c.l.b16 %v373
        %v502 = vunpack.c.l.b16 %v374
        %v503 = vpack.c.b16 %v488, %v487
        %v504 = vpack.c.b16 %v490, %v489
        %v505 = vpack.c.b16 %v492, %v491
        %v506 = vpack.c.b16 %v494, %v493
        %v507 = vpack.c.b16 %v496, %v495
        %v508 = vpack.c.b16 %v498, %v497
        %v509 = vpack.c.b16 %v500, %v499
        %v510 = vpack.c.b16 %v502, %v501
        %519 = vmatpush.bf16.msra.mxu0 %v510
        %520 = vmatpush.bf16.msra.mxu0 %v509
        %521 = vmatpush.bf16.msra.mxu0 %v508
        %522 = vmatpush.bf16.msra.mxu0 %v507
        %523 = vmatpush.bf16.msra.mxu0 %v506
        %524 = vmatpush.bf16.msra.mxu0 %v505
        %525 = vmatpush.bf16.msra.mxu0 %v504
        %526 = vmatpush.bf16.msra.mxu0 %v503
        %527 = vmatmul.bf16.gmra.mxu0 %v439
        %v528 = vpop.f32.mrf.mxu0
        %v529 = vadd.f32 0.0, %v528
        %v530 = vpop.f32.mrf.mxu0
        %v531 = vadd.f32 0.0, %v530
        %532 = vmatmul.bf16.gmra.mxu0 %v440
        %v533 = vpop.f32.mrf.mxu0
        %v534 = vadd.f32 0.0, %v533
        %v535 = vpop.f32.mrf.mxu0
        %v536 = vadd.f32 0.0, %v535
        %537 = vmatmul.bf16.gmra.mxu0 %v441
        %v538 = vpop.f32.mrf.mxu0
        %v539 = vadd.f32 0.0, %v538
        %v540 = vpop.f32.mrf.mxu0
        %v541 = vadd.f32 0.0, %v540
        %542 = vmatmul.bf16.gmra.mxu0 %v442
        %v543 = vpop.f32.mrf.mxu0
        %v544 = vadd.f32 0.0, %v543
        %v545 = vpop.f32.mrf.mxu0
        %v546 = vadd.f32 0.0, %v545
        %547 = vmatmul.bf16.gmra.mxu0 %v443
        %v548 = vpop.f32.mrf.mxu0
        %v549 = vadd.f32 0.0, %v548
        %v550 = vpop.f32.mrf.mxu0
        %v551 = vadd.f32 0.0, %v550
        %552 = vmatmul.bf16.gmra.mxu0 %v444
        %v553 = vpop.f32.mrf.mxu0
        %v554 = vadd.f32 0.0, %v553
        %v555 = vpop.f32.mrf.mxu0
        %v556 = vadd.f32 0.0, %v555
        %557 = vmatmul.bf16.gmra.mxu0 %v445
        %v558 = vpop.f32.mrf.mxu0
        %v559 = vadd.f32 0.0, %v558
        %v560 = vpop.f32.mrf.mxu0
        %v561 = vadd.f32 0.0, %v560
        %562 = vmatmul.bf16.gmra.mxu0 %v446
        %v563 = vpop.f32.mrf.mxu0
        %v564 = vadd.f32 0.0, %v563
        %v565 = vpop.f32.mrf.mxu0
        %v566 = vadd.f32 0.0, %v565
        %567 = vmatmul.bf16.gmra.mxu0 %v447
        %v568 = vpop.f32.mrf.mxu0
        %v569 = vadd.f32 0.0, %v568
        %v570 = vpop.f32.mrf.mxu0
        %v571 = vadd.f32 0.0, %v570
        %572 = vmatmul.bf16.gmra.mxu0 %v448
        %v573 = vpop.f32.mrf.mxu0
        %v574 = vadd.f32 0.0, %v573
        %v575 = vpop.f32.mrf.mxu0
        %v576 = vadd.f32 0.0, %v575
        %577 = vmatmul.bf16.gmra.mxu0 %v449
        %v578 = vpop.f32.mrf.mxu0
        %v579 = vadd.f32 0.0, %v578
        %v580 = vpop.f32.mrf.mxu0
        %v581 = vadd.f32 0.0, %v580
        %582 = vmatmul.bf16.gmra.mxu0 %v450
        %v583 = vpop.f32.mrf.mxu0
        %v584 = vadd.f32 0.0, %v583
        %v585 = vpop.f32.mrf.mxu0
        %v586 = vadd.f32 0.0, %v585
        %587 = vmatmul.bf16.gmra.mxu0 %v451
        %v588 = vpop.f32.mrf.mxu0
        %v589 = vadd.f32 0.0, %v588
        %v590 = vpop.f32.mrf.mxu0
        %v591 = vadd.f32 0.0, %v590
        %592 = vmatmul.bf16.gmra.mxu0 %v452
        %v593 = vpop.f32.mrf.mxu0
        %v594 = vadd.f32 0.0, %v593
        %v595 = vpop.f32.mrf.mxu0
        %v596 = vadd.f32 0.0, %v595
        %597 = vmatmul.bf16.gmra.mxu0 %v453
        %v598 = vpop.f32.mrf.mxu0
        %v599 = vadd.f32 0.0, %v598
        %v600 = vpop.f32.mrf.mxu0
        %v601 = vadd.f32 0.0, %v600
        %602 = vmatmul.bf16.gmra.mxu0 %v454
        %v603 = vpop.f32.mrf.mxu0
        %v604 = vadd.f32 0.0, %v603
        %v605 = vpop.f32.mrf.mxu0
        %v606 = vadd.f32 0.0, %v605
        %607 = vdwg.mxu0
        %v608 = vadd.f32 %v327, %v529
        %v609 = vadd.f32 %v328, %v531
        %v610 = vadd.f32 %v329, %v534
        %v611 = vadd.f32 %v330, %v536
        %v612 = vadd.f32 %v331, %v539
        %v613 = vadd.f32 %v332, %v541
        %v614 = vadd.f32 %v333, %v544
        %v615 = vadd.f32 %v334, %v546
        %v616 = vadd.f32 %v335, %v549
        %v617 = vadd.f32 %v336, %v551
        %v618 = vadd.f32 %v337, %v554
        %v619 = vadd.f32 %v338, %v556
        %v620 = vadd.f32 %v339, %v559
        %v621 = vadd.f32 %v340, %v561
        %v622 = vadd.f32 %v341, %v564
        %v623 = vadd.f32 %v342, %v566
        %v624 = vadd.f32 %v343, %v569
        %v625 = vadd.f32 %v344, %v571
        %v626 = vadd.f32 %v345, %v574
        %v627 = vadd.f32 %v346, %v576
        %v628 = vadd.f32 %v347, %v579
        %v629 = vadd.f32 %v348, %v581
        %v630 = vadd.f32 %v349, %v584
        %v631 = vadd.f32 %v350, %v586
        %v632 = vadd.f32 %v351, %v589
        %v633 = vadd.f32 %v352, %v591
        %v634 = vadd.f32 %v353, %v594
        %v635 = vadd.f32 %v354, %v596
        %v636 = vadd.f32 %v355, %v599
        %v637 = vadd.f32 %v356, %v601
        %v638 = vadd.f32 %v357, %v604
        %v639 = vadd.f32 %v358, %v606
        %640 = vst [vmem:[#allocation2] sm:$0xff] %v608
        %641 = vst [vmem:[#allocation2 + $0x8] sm:$0xff] %v609
        %642 = vst [vmem:[#allocation2 + $0x10] sm:$0xff] %v610
        %643 = vst [vmem:[#allocation2 + $0x18] sm:$0xff] %v611
        %644 = vst [vmem:[#allocation2 + $0x20] sm:$0xff] %v612
        %645 = vst [vmem:[#allocation2 + $0x28] sm:$0xff] %v613
        %646 = vst [vmem:[#allocation2 + $0x30] sm:$0xff] %v614
        %647 = vst [vmem:[#allocation2 + $0x38] sm:$0xff] %v615
        %648 = vst [vmem:[#allocation2 + $0x40] sm:$0xff] %v616
        %649 = vst [vmem:[#allocation2 + $0x48] sm:$0xff] %v617
        %650 = vst [vmem:[#allocation2 + $0x50] sm:$0xff] %v618
        %651 = vst [vmem:[#allocation2 + $0x58] sm:$0xff] %v619
        %652 = vst [vmem:[#allocation2 + $0x60] sm:$0xff] %v620
        %653 = vst [vmem:[#allocation2 + $0x68] sm:$0xff] %v621
        %654 = vst [vmem:[#allocation2 + $0x70] sm:$0xff] %v622
        %655 = vst [vmem:[#allocation2 + $0x78] sm:$0xff] %v623
        %656 = vst [vmem:[#allocation2 + $0x80] sm:$0xff] %v624
        %657 = vst [vmem:[#allocation2 + $0x88] sm:$0xff] %v625
        %658 = vst [vmem:[#allocation2 + $0x90] sm:$0xff] %v626
        %659 = vst [vmem:[#allocation2 + $0x98] sm:$0xff] %v627
        %660 = vst [vmem:[#allocation2 + $0xa0] sm:$0xff] %v628
        %661 = vst [vmem:[#allocation2 + $0xa8] sm:$0xff] %v629
        %662 = vst [vmem:[#allocation2 + $0xb0] sm:$0xff] %v630
        %663 = vst [vmem:[#allocation2 + $0xb8] sm:$0xff] %v631
        %664 = vst [vmem:[#allocation2 + $0xc0] sm:$0xff] %v632
        %665 = vst [vmem:[#allocation2 + $0xc8] sm:$0xff] %v633
        %666 = vst [vmem:[#allocation2 + $0xd0] sm:$0xff] %v634
        %667 = vst [vmem:[#allocation2 + $0xd8] sm:$0xff] %v635
        %668 = vst [vmem:[#allocation2 + $0xe0] sm:$0xff] %v636
        %669 = vst [vmem:[#allocation2 + $0xe8] sm:$0xff] %v637
        %670 = vst [vmem:[#allocation2 + $0xf0] sm:$0xff] %v638
        %671 = vst [vmem:[#allocation2 + $0xf8] sm:$0xff] %v639
        // Predicated region
        $region41: #{tpu_custom_call.1} parent=27 // pred_check
          %p672 = pneg %p259
        $region42: #{tpu_custom_call.1} parent=27 // pred_check_branch
          %674 = sbr.rel (%p672) target = $region44
        $region43: #{tpu_custom_call.1} parent=27 // pred_region
          %v675 = vld [vmem:[#allocation2] sm:$0xff]
          %v676 = vld [vmem:[#allocation2 + $0x8] sm:$0xff]
          %v677 = vld [vmem:[#allocation2 + $0x10] sm:$0xff]
          %v678 = vld [vmem:[#allocation2 + $0x18] sm:$0xff]
          %v679 = vld [vmem:[#allocation2 + $0x20] sm:$0xff]
          %v680 = vld [vmem:[#allocation2 + $0x28] sm:$0xff]
          %v681 = vld [vmem:[#allocation2 + $0x30] sm:$0xff]
          %v682 = vld [vmem:[#allocation2 + $0x38] sm:$0xff]
          %v683 = vld [vmem:[#allocation2 + $0x40] sm:$0xff]
          %v684 = vld [vmem:[#allocation2 + $0x48] sm:$0xff]
          %v685 = vld [vmem:[#allocation2 + $0x50] sm:$0xff]
          %v686 = vld [vmem:[#allocation2 + $0x58] sm:$0xff]
          %v687 = vld [vmem:[#allocation2 + $0x60] sm:$0xff]
          %v688 = vld [vmem:[#allocation2 + $0x68] sm:$0xff]
          %v689 = vld [vmem:[#allocation2 + $0x70] sm:$0xff]
          %v690 = vld [vmem:[#allocation2 + $0x78] sm:$0xff]
          %v691 = vld [vmem:[#allocation2 + $0x80] sm:$0xff]
          %v692 = vld [vmem:[#allocation2 + $0x88] sm:$0xff]
          %v693 = vld [vmem:[#allocation2 + $0x90] sm:$0xff]
          %v694 = vld [vmem:[#allocation2 + $0x98] sm:$0xff]
          %v695 = vld [vmem:[#allocation2 + $0xa0] sm:$0xff]
          %v696 = vld [vmem:[#allocation2 + $0xa8] sm:$0xff]
          %v697 = vld [vmem:[#allocation2 + $0xb0] sm:$0xff]
          %v698 = vld [vmem:[#allocation2 + $0xb8] sm:$0xff]
          %v699 = vld [vmem:[#allocation2 + $0xc0] sm:$0xff]
          %v700 = vld [vmem:[#allocation2 + $0xc8] sm:$0xff]
          %v701 = vld [vmem:[#allocation2 + $0xd0] sm:$0xff]
          %v702 = vld [vmem:[#allocation2 + $0xd8] sm:$0xff]
          %v703 = vld [vmem:[#allocation2 + $0xe0] sm:$0xff]
          %v704 = vld [vmem:[#allocation2 + $0xe8] sm:$0xff]
          %v705 = vld [vmem:[#allocation2 + $0xf0] sm:$0xff]
          %v706 = vld [vmem:[#allocation2 + $0xf8] sm:$0xff]
          %v707 = vpack.c.bf16 %v675, %v675
          %v708 = vpack.c.bf16 %v676, %v676
          %v709 = vpack.c.bf16 %v677, %v677
          %v710 = vpack.c.bf16 %v678, %v678
          %v711 = vpack.c.bf16 %v679, %v679
          %v712 = vpack.c.bf16 %v680, %v680
          %v713 = vpack.c.bf16 %v681, %v681
          %v714 = vpack.c.bf16 %v682, %v682
          %v715 = vpack.c.bf16 %v683, %v683
          %v716 = vpack.c.bf16 %v684, %v684
          %v717 = vpack.c.bf16 %v685, %v685
          %v718 = vpack.c.bf16 %v686, %v686
          %v719 = vpack.c.bf16 %v687, %v687
          %v720 = vpack.c.bf16 %v688, %v688
          %v721 = vpack.c.bf16 %v689, %v689
          %v722 = vpack.c.bf16 %v690, %v690
          %v723 = vpack.c.bf16 %v691, %v691
          %v724 = vpack.c.bf16 %v692, %v692
          %v725 = vpack.c.bf16 %v693, %v693
          %v726 = vpack.c.bf16 %v694, %v694
          %v727 = vpack.c.bf16 %v695, %v695
          %v728 = vpack.c.bf16 %v696, %v696
          %v729 = vpack.c.bf16 %v697, %v697
          %v730 = vpack.c.bf16 %v698, %v698
          %v731 = vpack.c.bf16 %v699, %v699
          %v732 = vpack.c.bf16 %v700, %v700
          %v733 = vpack.c.bf16 %v701, %v701
          %v734 = vpack.c.bf16 %v702, %v702
          %v735 = vpack.c.bf16 %v703, %v703
          %v736 = vpack.c.bf16 %v704, %v704
          %v737 = vpack.c.bf16 %v705, %v705
          %v738 = vpack.c.bf16 %v706, %v706
          %739 = vst [vmem:[%s248] sm:$0xf] %v707
          %740 = vst [vmem:[%s248 + $0x4] sm:$0xf] %v708
          %741 = vst [vmem:[%s248 + $0x8] sm:$0xf] %v709
          %742 = vst [vmem:[%s248 + $0xc] sm:$0xf] %v710
          %743 = vst [vmem:[%s248 + $0x10] sm:$0xf] %v711
          %744 = vst [vmem:[%s248 + $0x14] sm:$0xf] %v712
          %745 = vst [vmem:[%s248 + $0x18] sm:$0xf] %v713
          %746 = vst [vmem:[%s248 + $0x1c] sm:$0xf] %v714
          %747 = vst [vmem:[%s248 + $0x20] sm:$0xf] %v715
          %748 = vst [vmem:[%s248 + $0x24] sm:$0xf] %v716
          %749 = vst [vmem:[%s248 + $0x28] sm:$0xf] %v717
          %750 = vst [vmem:[%s248 + $0x2c] sm:$0xf] %v718
          %751 = vst [vmem:[%s248 + $0x30] sm:$0xf] %v719
          %752 = vst [vmem:[%s248 + $0x34] sm:$0xf] %v720
          %753 = vst [vmem:[%s248 + $0x38] sm:$0xf] %v721
          %754 = vst [vmem:[%s248 + $0x3c] sm:$0xf] %v722
          %755 = vst [vmem:[%s248 + $0x40] sm:$0xf] %v723
          %756 = vst [vmem:[%s248 + $0x44] sm:$0xf] %v724
          %757 = vst [vmem:[%s248 + $0x48] sm:$0xf] %v725
          %758 = vst [vmem:[%s248 + $0x4c] sm:$0xf] %v726
          %759 = vst [vmem:[%s248 + $0x50] sm:$0xf] %v727
          %760 = vst [vmem:[%s248 + $0x54] sm:$0xf] %v728
          %761 = vst [vmem:[%s248 + $0x58] sm:$0xf] %v729
          %762 = vst [vmem:[%s248 + $0x5c] sm:$0xf] %v730
          %763 = vst [vmem:[%s248 + $0x60] sm:$0xf] %v731
          %764 = vst [vmem:[%s248 + $0x64] sm:$0xf] %v732
          %765 = vst [vmem:[%s248 + $0x68] sm:$0xf] %v733
          %766 = vst [vmem:[%s248 + $0x6c] sm:$0xf] %v734
          %767 = vst [vmem:[%s248 + $0x70] sm:$0xf] %v735
          %768 = vst [vmem:[%s248 + $0x74] sm:$0xf] %v736
          %769 = vst [vmem:[%s248 + $0x78] sm:$0xf] %v737
          %770 = vst [vmem:[%s248 + $0x7c] sm:$0xf] %v738
          %s771 = smul.u32 %s30, 256
          %v772 = vlaneseq
          %v773 = vshrl.u32 %v772, 7
          %v774 = vadd.s32 %v773, 8
          %v775 = vadd.s32 %v773, 16
          %v776 = vadd.s32 %v773, 24
          %v777 = vadd.s32 %v773, 32
          %v778 = vadd.s32 %v773, 40
          %v779 = vadd.s32 %v773, 48
          %v780 = vadd.s32 %v773, 56
          %v781 = vadd.s32 %v773, 64
          %v782 = vadd.s32 %v773, 72
          %v783 = vadd.s32 %v773, 80
          %v784 = vadd.s32 %v773, 88
          %v785 = vadd.s32 %v773, 96
          %v786 = vadd.s32 %v773, 104
          %v787 = vadd.s32 %v773, 112
          %v788 = vadd.s32 %v773, 120
          %v789 = vadd.s32 %v773, 128
          %v790 = vadd.s32 %v773, 136
          %v791 = vadd.s32 %v773, 144
          %v792 = vadd.s32 %v773, 152
          %v793 = vadd.s32 %v773, 160
          %v794 = vadd.s32 %v773, 168
          %v795 = vadd.s32 %v773, 176
          %v796 = vadd.s32 %v773, 184
          %v797 = vadd.s32 %v773, 192
          %v798 = vadd.s32 %v773, 200
          %v799 = vadd.s32 %v773, 208
          %v800 = vadd.s32 %v773, 216
          %v801 = vadd.s32 %v773, 224
          %v802 = vadd.s32 %v773, 232
          %v803 = vadd.s32 %v773, 240
          %v804 = vadd.s32 %v773, 248
          %v805 = vstv %s771
          %v806 = vadd.s32 %v805, %v773
          %v807 = vadd.s32 %v805, %v774
          %v808 = vadd.s32 %v805, %v775
          %v809 = vadd.s32 %v805, %v776
          %v810 = vadd.s32 %v805, %v777
          %v811 = vadd.s32 %v805, %v778
          %v812 = vadd.s32 %v805, %v779
          %v813 = vadd.s32 %v805, %v780
          %v814 = vadd.s32 %v805, %v781
          %v815 = vadd.s32 %v805, %v782
          %v816 = vadd.s32 %v805, %v783
          %v817 = vadd.s32 %v805, %v784
          %v818 = vadd.s32 %v805, %v785
          %v819 = vadd.s32 %v805, %v786
          %v820 = vadd.s32 %v805, %v787
          %v821 = vadd.s32 %v805, %v788
          %v822 = vadd.s32 %v805, %v789
          %v823 = vadd.s32 %v805, %v790
          %v824 = vadd.s32 %v805, %v791
          %v825 = vadd.s32 %v805, %v792
          %v826 = vadd.s32 %v805, %v793
          %v827 = vadd.s32 %v805, %v794
          %v828 = vadd.s32 %v805, %v795
          %v829 = vadd.s32 %v805, %v796
          %v830 = vadd.s32 %v805, %v797
          %v831 = vadd.s32 %v805, %v798
          %v832 = vadd.s32 %v805, %v799
          %v833 = vadd.s32 %v805, %v800
          %v834 = vadd.s32 %v805, %v801
          %v835 = vadd.s32 %v805, %v802
          %v836 = vadd.s32 %v805, %v803
          %v837 = vadd.s32 %v805, %v804
          %vm838 = vcmp.lt.s32.totalorder %v806, 512
          %vm839 = vcmp.lt.s32.totalorder %v807, 512
          %vm840 = vcmp.lt.s32.totalorder %v808, 512
          %vm841 = vcmp.lt.s32.totalorder %v809, 512
          %vm842 = vcmp.lt.s32.totalorder %v810, 512
          %vm843 = vcmp.lt.s32.totalorder %v811, 512
          %vm844 = vcmp.lt.s32.totalorder %v812, 512
          %vm845 = vcmp.lt.s32.totalorder %v813, 512
          %vm846 = vcmp.lt.s32.totalorder %v814, 512
          %vm847 = vcmp.lt.s32.totalorder %v815, 512
          %vm848 = vcmp.lt.s32.totalorder %v816, 512
          %vm849 = vcmp.lt.s32.totalorder %v817, 512
          %vm850 = vcmp.lt.s32.totalorder %v818, 512
          %vm851 = vcmp.lt.s32.totalorder %v819, 512
          %vm852 = vcmp.lt.s32.totalorder %v820, 512
          %vm853 = vcmp.lt.s32.totalorder %v821, 512
          %vm854 = vcmp.lt.s32.totalorder %v822, 512
          %vm855 = vcmp.lt.s32.totalorder %v823, 512
          %vm856 = vcmp.lt.s32.totalorder %v824, 512
          %vm857 = vcmp.lt.s32.totalorder %v825, 512
          %vm858 = vcmp.lt.s32.totalorder %v826, 512
          %vm859 = vcmp.lt.s32.totalorder %v827, 512
          %vm860 = vcmp.lt.s32.totalorder %v828, 512
          %vm861 = vcmp.lt.s32.totalorder %v829, 512
          %vm862 = vcmp.lt.s32.totalorder %v830, 512
          %vm863 = vcmp.lt.s32.totalorder %v831, 512
          %vm864 = vcmp.lt.s32.totalorder %v832, 512
          %vm865 = vcmp.lt.s32.totalorder %v833, 512
          %vm866 = vcmp.lt.s32.totalorder %v834, 512
          %vm867 = vcmp.lt.s32.totalorder %v835, 512
          %vm868 = vcmp.lt.s32.totalorder %v836, 512
          %vm869 = vcmp.lt.s32.totalorder %v837, 512
          %v870 = vsel %vm838, 1, 0
          %v871 = vsel %vm839, 1, 0
          %v872 = vsel %vm840, 1, 0
          %v873 = vsel %vm841, 1, 0
          %v874 = vsel %vm842, 1, 0
          %v875 = vsel %vm843, 1, 0
          %v876 = vsel %vm844, 1, 0
          %v877 = vsel %vm845, 1, 0
          %v878 = vsel %vm846, 1, 0
          %v879 = vsel %vm847, 1, 0
          %v880 = vsel %vm848, 1, 0
          %v881 = vsel %vm849, 1, 0
          %v882 = vsel %vm850, 1, 0
          %v883 = vsel %vm851, 1, 0
          %v884 = vsel %vm852, 1, 0
          %v885 = vsel %vm853, 1, 0
          %v886 = vsel %vm854, 1, 0
          %v887 = vsel %vm855, 1, 0
          %v888 = vsel %vm856, 1, 0
          %v889 = vsel %vm857, 1, 0
          %v890 = vsel %vm858, 1, 0
          %v891 = vsel %vm859, 1, 0
          %v892 = vsel %vm860, 1, 0
          %v893 = vsel %vm861, 1, 0
          %v894 = vsel %vm862, 1, 0
          %v895 = vsel %vm863, 1, 0
          %v896 = vsel %vm864, 1, 0
          %v897 = vsel %vm865, 1, 0
          %v898 = vsel %vm866, 1, 0
          %v899 = vsel %vm867, 1, 0
          %v900 = vsel %vm868, 1, 0
          %v901 = vsel %vm869, 1, 0
          %v902 = vcvt.s32.f32 %v870
          %v903 = vcvt.s32.f32 %v871
          %v904 = vcvt.s32.f32 %v872
          %v905 = vcvt.s32.f32 %v873
          %v906 = vcvt.s32.f32 %v874
          %v907 = vcvt.s32.f32 %v875
          %v908 = vcvt.s32.f32 %v876
          %v909 = vcvt.s32.f32 %v877
          %v910 = vcvt.s32.f32 %v878
          %v911 = vcvt.s32.f32 %v879
          %v912 = vcvt.s32.f32 %v880
          %v913 = vcvt.s32.f32 %v881
          %v914 = vcvt.s32.f32 %v882
          %v915 = vcvt.s32.f32 %v883
          %v916 = vcvt.s32.f32 %v884
          %v917 = vcvt.s32.f32 %v885
          %v918 = vcvt.s32.f32 %v886
          %v919 = vcvt.s32.f32 %v887
          %v920 = vcvt.s32.f32 %v888
          %v921 = vcvt.s32.f32 %v889
          %v922 = vcvt.s32.f32 %v890
          %v923 = vcvt.s32.f32 %v891
          %v924 = vcvt.s32.f32 %v892
          %v925 = vcvt.s32.f32 %v893
          %v926 = vcvt.s32.f32 %v894
          %v927 = vcvt.s32.f32 %v895
          %v928 = vcvt.s32.f32 %v896
          %v929 = vcvt.s32.f32 %v897
          %v930 = vcvt.s32.f32 %v898
          %v931 = vcvt.s32.f32 %v899
          %v932 = vcvt.s32.f32 %v900
          %v933 = vcvt.s32.f32 %v901
          %s934 = ssub.s32 512, %s771
          %p935 = scmp.lt.s32.totalorder %s934, 256
          %s936 = scalar_select %p935, %s934, 256
          %s937 = scvt.s32.f32 %s936
          %v938 = vmul.f32 %v675, %v902
          %v939 = vmul.f32 %v676, %v903
          %v940 = vmul.f32 %v677, %v904
          %v941 = vmul.f32 %v678, %v905
          %v942 = vmul.f32 %v679, %v906
          %v943 = vmul.f32 %v680, %v907
          %v944 = vmul.f32 %v681, %v908
          %v945 = vmul.f32 %v682, %v909
          %v946 = vmul.f32 %v683, %v910
          %v947 = vmul.f32 %v684, %v911
          %v948 = vmul.f32 %v685, %v912
          %v949 = vmul.f32 %v686, %v913
          %v950 = vmul.f32 %v687, %v914
          %v951 = vmul.f32 %v688, %v915
          %v952 = vmul.f32 %v689, %v916
          %v953 = vmul.f32 %v690, %v917
          %v954 = vmul.f32 %v691, %v918
          %v955 = vmul.f32 %v692, %v919
          %v956 = vmul.f32 %v693, %v920
          %v957 = vmul.f32 %v694, %v921
          %v958 = vmul.f32 %v695, %v922
          %v959 = vmul.f32 %v696, %v923
          %v960 = vmul.f32 %v697, %v924
          %v961 = vmul.f32 %v698, %v925
          %v962 = vmul.f32 %v699, %v926
          %v963 = vmul.f32 %v700, %v927
          %v964 = vmul.f32 %v701, %v928
          %v965 = vmul.f32 %v702, %v929
          %v966 = vmul.f32 %v703, %v930
          %v967 = vmul.f32 %v704, %v931
          %v968 = vmul.f32 %v705, %v932
          %v969 = vmul.f32 %v706, %v933
          %v970 = vadd.f32 %v938, %v939
          %v971 = vadd.f32 %v970, %v940
          %v972 = vadd.f32 %v971, %v941
          %v973 = vadd.f32 %v972, %v942
          %v974 = vadd.f32 %v973, %v943
          %v975 = vadd.f32 %v974, %v944
          %v976 = vadd.f32 %v975, %v945
          %v977 = vadd.f32 %v976, %v946
          %v978 = vadd.f32 %v977, %v947
          %v979 = vadd.f32 %v978, %v948
          %v980 = vadd.f32 %v979, %v949
          %v981 = vadd.f32 %v980, %v950
          %v982 = vadd.f32 %v981, %v951
          %v983 = vadd.f32 %v982, %v952
          %v984 = vadd.f32 %v983, %v953
          %v985 = vadd.f32 %v984, %v954
          %v986 = vadd.f32 %v985, %v955
          %v987 = vadd.f32 %v986, %v956
          %v988 = vadd.f32 %v987, %v957
          %v989 = vadd.f32 %v988, %v958
          %v990 = vadd.f32 %v989, %v959
          %v991 = vadd.f32 %v990, %v960
          %v992 = vadd.f32 %v991, %v961
          %v993 = vadd.f32 %v992, %v962
          %v994 = vadd.f32 %v993, %v963
          %v995 = vadd.f32 %v994, %v964
          %v996 = vadd.f32 %v995, %v965
          %v997 = vadd.f32 %v996, %v966
          %v998 = vadd.f32 %v997, %v967
          %v999 = vadd.f32 %v998, %v968
          %v1000 = vadd.f32 %v999, %v969
          %v1001 = vrot.slane %v1000, 4
          %v1002 = vadd.f32 %v1000, %v1001
          %v1003 = vrot.slane %v1002, 2
          %v1004 = vadd.f32 %v1002, %v1003
          %v1005 = vrot.slane %v1004, 1
          %v1006 = vadd.f32 %v1004, %v1005
          %v1007 = vstv %s937
          %v1008 = vrcp.pop %v1007
          %v1009 = vmul.f32 %v1007, %v1008
          %v1010 = vsub.f32 1.0, %v1009
          %v1011 = vmul.f32 %v1008, %v1010
          %v1012 = vadd.f32 %v1008, %v1011
          %vm1013 = vweird.f32 %v1007
          %vm1014 = vweird.f32 %v1008
          %vm1015 = vmor %vm1013, %vm1014
          %v1016 = vsel %vm1015, %v1008, %v1012
          %v1017 = vand.u32 2147483647, %v1007
          %vm1018 = vcmp.eq.f32.partialorder %v1017, 8.507059e+37
          %v1019 = vand.u32 %v1007, 2147483648
          %v1020 = vor.u32 1.1754944e-38, %v1019
          %v1021 = vsel %vm1018, %v1020, %v1016
          %v1022 = vmul.f32 %v1006, %v1021
          %v1023 = vsub.f32 %v675, %v1022
          %v1024 = vsub.f32 %v676, %v1022
          %v1025 = vsub.f32 %v677, %v1022
          %v1026 = vsub.f32 %v678, %v1022
          %v1027 = vsub.f32 %v679, %v1022
          %v1028 = vsub.f32 %v680, %v1022
          %v1029 = vsub.f32 %v681, %v1022
          %v1030 = vsub.f32 %v682, %v1022
          %v1031 = vsub.f32 %v683, %v1022
          %v1032 = vsub.f32 %v684, %v1022
          %v1033 = vsub.f32 %v685, %v1022
          %v1034 = vsub.f32 %v686, %v1022
          %v1035 = vsub.f32 %v687, %v1022
          %v1036 = vsub.f32 %v688, %v1022
          %v1037 = vsub.f32 %v689, %v1022
          %v1038 = vsub.f32 %v690, %v1022
          %v1039 = vsub.f32 %v691, %v1022
          %v1040 = vsub.f32 %v692, %v1022
          %v1041 = vsub.f32 %v693, %v1022
          %v1042 = vsub.f32 %v694, %v1022
          %v1043 = vsub.f32 %v695, %v1022
          %v1044 = vsub.f32 %v696, %v1022
          %v1045 = vsub.f32 %v697, %v1022
          %v1046 = vsub.f32 %v698, %v1022
          %v1047 = vsub.f32 %v699, %v1022
          %v1048 = vsub.f32 %v700, %v1022
          %v1049 = vsub.f32 %v701, %v1022
          %v1050 = vsub.f32 %v702, %v1022
          %v1051 = vsub.f32 %v703, %v1022
          %v1052 = vsub.f32 %v704, %v1022
          %v1053 = vsub.f32 %v705, %v1022
          %v1054 = vsub.f32 %v706, %v1022
          %v1055 = vmul.f32 %v1023, %v902
          %v1056 = vmul.f32 %v1024, %v903
          %v1057 = vmul.f32 %v1025, %v904
          %v1058 = vmul.f32 %v1026, %v905
          %v1059 = vmul.f32 %v1027, %v906
          %v1060 = vmul.f32 %v1028, %v907
          %v1061 = vmul.f32 %v1029, %v908
          %v1062 = vmul.f32 %v1030, %v909
          %v1063 = vmul.f32 %v1031, %v910
          %v1064 = vmul.f32 %v1032, %v911
          %v1065 = vmul.f32 %v1033, %v912
          %v1066 = vmul.f32 %v1034, %v913
          %v1067 = vmul.f32 %v1035, %v914
          %v1068 = vmul.f32 %v1036, %v915
          %v1069 = vmul.f32 %v1037, %v916
          %v1070 = vmul.f32 %v1038, %v917
          %v1071 = vmul.f32 %v1039, %v918
          %v1072 = vmul.f32 %v1040, %v919
          %v1073 = vmul.f32 %v1041, %v920
          %v1074 = vmul.f32 %v1042, %v921
          %v1075 = vmul.f32 %v1043, %v922
          %v1076 = vmul.f32 %v1044, %v923
          %v1077 = vmul.f32 %v1045, %v924
          %v1078 = vmul.f32 %v1046, %v925
          %v1079 = vmul.f32 %v1047, %v926
          %v1080 = vmul.f32 %v1048, %v927
          %v1081 = vmul.f32 %v1049, %v928
          %v1082 = vmul.f32 %v1050, %v929
          %v1083 = vmul.f32 %v1051, %v930
          %v1084 = vmul.f32 %v1052, %v931
          %v1085 = vmul.f32 %v1053, %v932
          %v1086 = vmul.f32 %v1054, %v933
          %v1087 = vmul.f32 %v1055, %v1055
          %v1088 = vmul.f32 %v1056, %v1056
          %v1089 = vmul.f32 %v1057, %v1057
          %v1090 = vmul.f32 %v1058, %v1058
          %v1091 = vmul.f32 %v1059, %v1059
          %v1092 = vmul.f32 %v1060, %v1060
          %v1093 = vmul.f32 %v1061, %v1061
          %v1094 = vmul.f32 %v1062, %v1062
          %v1095 = vmul.f32 %v1063, %v1063
          %v1096 = vmul.f32 %v1064, %v1064
          %v1097 = vmul.f32 %v1065, %v1065
          %v1098 = vmul.f32 %v1066, %v1066
          %v1099 = vmul.f32 %v1067, %v1067
          %v1100 = vmul.f32 %v1068, %v1068
          %v1101 = vmul.f32 %v1069, %v1069
          %v1102 = vmul.f32 %v1070, %v1070
          %v1103 = vmul.f32 %v1071, %v1071
          %v1104 = vmul.f32 %v1072, %v1072
          %v1105 = vmul.f32 %v1073, %v1073
          %v1106 = vmul.f32 %v1074, %v1074
          %v1107 = vmul.f32 %v1075, %v1075
          %v1108 = vmul.f32 %v1076, %v1076
          %v1109 = vmul.f32 %v1077, %v1077
          %v1110 = vmul.f32 %v1078, %v1078
          %v1111 = vmul.f32 %v1079, %v1079
          %v1112 = vmul.f32 %v1080, %v1080
          %v1113 = vmul.f32 %v1081, %v1081
          %v1114 = vmul.f32 %v1082, %v1082
          %v1115 = vmul.f32 %v1083, %v1083
          %v1116 = vmul.f32 %v1084, %v1084
          %v1117 = vmul.f32 %v1085, %v1085
          %v1118 = vmul.f32 %v1086, %v1086
          %v1119 = vadd.f32 %v1087, %v1088
          %v1120 = vadd.f32 %v1119, %v1089
          %v1121 = vadd.f32 %v1120, %v1090
          %v1122 = vadd.f32 %v1121, %v1091
          %v1123 = vadd.f32 %v1122, %v1092
          %v1124 = vadd.f32 %v1123, %v1093
          %v1125 = vadd.f32 %v1124, %v1094
          %v1126 = vadd.f32 %v1125, %v1095
          %v1127 = vadd.f32 %v1126, %v1096
          %v1128 = vadd.f32 %v1127, %v1097
          %v1129 = vadd.f32 %v1128, %v1098
          %v1130 = vadd.f32 %v1129, %v1099
          %v1131 = vadd.f32 %v1130, %v1100
          %v1132 = vadd.f32 %v1131, %v1101
          %v1133 = vadd.f32 %v1132, %v1102
          %v1134 = vadd.f32 %v1133, %v1103
          %v1135 = vadd.f32 %v1134, %v1104
          %v1136 = vadd.f32 %v1135, %v1105
          %v1137 = vadd.f32 %v1136, %v1106
          %v1138 = vadd.f32 %v1137, %v1107
          %v1139 = vadd.f32 %v1138, %v1108
          %v1140 = vadd.f32 %v1139, %v1109
          %v1141 = vadd.f32 %v1140, %v1110
          %v1142 = vadd.f32 %v1141, %v1111
          %v1143 = vadd.f32 %v1142, %v1112
          %v1144 = vadd.f32 %v1143, %v1113
          %v1145 = vadd.f32 %v1144, %v1114
          %v1146 = vadd.f32 %v1145, %v1115
          %v1147 = vadd.f32 %v1146, %v1116
          %v1148 = vadd.f32 %v1147, %v1117
          %v1149 = vadd.f32 %v1148, %v1118
          %v1150 = vrot.slane %v1149, 4
          %v1151 = vadd.f32 %v1149, %v1150
          %v1152 = vrot.slane %v1151, 2
          %v1153 = vadd.f32 %v1151, %v1152
          %v1154 = vrot.slane %v1153, 1
          %v1155 = vadd.f32 %v1153, %v1154
          %vm1156 = vcmp.eq.s32.totalorder %v773, 0
          %vm1157 = vcmp.eq.s32.totalorder %v773, 1
          %v1158 = vsel %vm1157, %v1155, 0.0
          %v1159 = vsel %vm1156, %v1006, %v1158
          %1160 = vst [vmem:[%s255] sm:$0xff] %v1159
        $region44: #{tpu_custom_call.1} parent=27 // pred_fallthru
          _
        %s1161 = sand.u32 %s110, 1
        %s1162 = scalar_lea.sflag [#allocation5], %s1161
        %s1163 = sand.u32 %s110, 1
        %s1164 = smul.addr %s1163, 128
        %s1165 = scalar_lea.vmem [#allocation8], %s1164
        %s1166 = sand.u32 %s138, 1
        %s1167 = scalar_lea.sflag [#allocation10], %s1166
        %s1168 = sand.u32 %s138, 1
        %s1169 = smul.addr %s1168, 8
        %s1170 = scalar_lea.vmem [#allocation9], %s1169
        // Predicated region
        $region45: #{tpu_custom_call.1} parent=27 // pred_check
          %p1171 = pneg %p120
        $region46: #{tpu_custom_call.1} parent=27 // pred_check_branch
          %1173 = sbr.rel (%p1171) target = $region48
        $region47: #{tpu_custom_call.1} parent=27 // pred_region
          %s1174 = smul.u32 32, %s30
          %1176 = vsyncadd %s1162, 0
          %s1177 = sadd.s32 %s31, %s1174
          %s1178 = smul.addr %s1177, 4
          %s1179 = scalar_lea.hbm %s2, %s1178
          %s1180 = sshll.u32 %s1165, 4
          %s1181 = int_to_ptr.vmem [resolvable:$true] %s1180
          %s1182 = sshll.u32 %s1179, 4
          %s1183 = int_to_ptr.hbm [resolvable:$true] %s1182
          %1188 = dma.vmem_to_hbm [thread:$0]  %s1181, 2048, %s1183, %s1162, 64, 64, 4
        $region48: #{tpu_custom_call.1} parent=27 // pred_fallthru
          _
        // Predicated region
        $region49: #{tpu_custom_call.1} parent=27 // pred_check
          %p1189 = pneg %p148
        $region50: #{tpu_custom_call.1} parent=27 // pred_check_branch
          %1191 = sbr.rel (%p1189) target = $region52
        $region51: #{tpu_custom_call.1} parent=27 // pred_region
          %1193 = vsyncadd %s1167, 0
          %s1194 = sadd.s32 %s31, %s30
          %s1195 = smul.addr %s1194, 8
          %s1196 = scalar_lea.hbm %s3, %s1195
          %s1198 = sshll.u32 %s1170, 4
          %s1199 = int_to_ptr.vmem [resolvable:$true] %s1198
          %s1200 = sshll.u32 %s1196, 4
          %s1201 = int_to_ptr.hbm [resolvable:$true] %s1200
          %1203 = dma.vmem_to_hbm [thread:$0]  %s1199, 128, %s1201, %s1167
        $region52: #{tpu_custom_call.1} parent=27 // pred_fallthru
          _
      $region28: #{tpu_custom_call.1} parent=5 // pred_fallthru
        _
      %p1204 = scmp.le.s32.totalorder 2, %s20
      // Predicated region
      $region53: #{tpu_custom_call.1} parent=5 // pred_check
        %p1205 = pneg %p1204
      $region54: #{tpu_custom_call.1} parent=5 // pred_check_branch
        %1207 = sbr.rel (%p1205) target = $region56
      $region55: #{tpu_custom_call.1} parent=5 // pred_region
        %s1208 = ssub.s32 %s20, 2
        // Predicated region
        $region57: #{tpu_custom_call.1} parent=55 // pred_check
          %p1209 = pneg %p126
        $region58: #{tpu_custom_call.1} parent=55 // pred_check_branch
          %1211 = sbr.rel (%p1209) target = $region60
        $region59: #{tpu_custom_call.1} parent=55 // pred_region
          %s1212 = sand.u32 %s111, 1
          %s1213 = scalar_lea.sflag [#allocation5], %s1212
          %s1214 = sand.u32 %s111, 1
          %s1215 = smul.addr %s1214, 128
          %s1216 = scalar_lea.vmem [#allocation8], %s1215
          %1218 = dma.done %s1213, 2048
        $region60: #{tpu_custom_call.1} parent=55 // pred_fallthru
          _
        // Predicated region
        $region61: #{tpu_custom_call.1} parent=55 // pred_check
          %p1219 = pneg %p154
        $region62: #{tpu_custom_call.1} parent=55 // pred_check_branch
          %1221 = sbr.rel (%p1219) target = $region64
        $region63: #{tpu_custom_call.1} parent=55 // pred_region
          %s1222 = sand.u32 %s139, 1
          %s1223 = scalar_lea.sflag [#allocation10], %s1222
          %s1224 = sand.u32 %s139, 1
          %s1225 = smul.addr %s1224, 8
          %s1226 = scalar_lea.vmem [#allocation9], %s1225
          %1228 = dma.done %s1223, 128
        $region64: #{tpu_custom_call.1} parent=55 // pred_fallthru
          _
      $region56: #{tpu_custom_call.1} parent=5 // pred_fallthru
        _
    $region6: #{tpu_custom_call.1} parent=1 // loop_footer
      %s24 = sadd.s32 1, %s20
    $region7: #{tpu_custom_call.1} parent=1 // loop_footer_branch
      %19 = sbr.rel target = $region3
    $region8: #{tpu_custom_call.1} parent=1 // loop_exit
      _
    %1229 = vsyncpa [#allocation4], 1
    %s1230 = scalar_lea.sflag [#allocation4], 1
    %1231 = vsyncpa %s1230, 1
    %1232 = vsyncpa [#allocation7], 1
    %1233 = vsyncpa [#allocation5], 1
    %s1234 = scalar_lea.sflag [#allocation5], 1
    %1235 = vsyncpa %s1234, 1
    %1236 = vsyncpa [#allocation10], 1
    %s1237 = scalar_lea.sflag [#allocation10], 1
    %1238 = vsyncpa %s1237, 1

</llo_original>
